<compile_context>
chip_gen: v7x
topology: tpu7x:2x2x1
jax: 0.10.0
libtpu: 0.0.40
codegen_flags: <defaults>
</compile_context>

<pallas_src>
import functools

import numpy as np
import jax
import jax.numpy as jnp
from jax.experimental import pallas as pl
from jax.experimental.pallas import tpu as pltpu

# ---- model hyper-parameters (small, consistent with the module) ----
DRUGS_DIM = 32      # drugs_inputdim
SIDES_DIM = 16      # sides_inputdim
LATENT_DIM = 32     # latent_dim
FEATURE_DIM = 16    # feature_dim
HEADS = 4           # heads  (dq = dk = dv = LATENT_DIM // HEADS = 8)
DRUG_CHUNKS = 11
SIDE_CHUNKS = 4

LEAKY_SLOPE = 0.01
BN_EPS = 1e-5
LN_EPS = 1e-5
OUT_PAD = 128       # lane-dense output slab width


def _leaky_relu(x):
    return jnp.where(x >= 0, x, LEAKY_SLOPE * x)


def _layernorm(x, gamma, beta):
    mu = jnp.mean(x, axis=-1, keepdims=True)
    d = x - mu
    var = jnp.mean(d * d, axis=-1, keepdims=True)
    return d * jax.lax.rsqrt(var + LN_EPS) * gamma + beta


# ----------------------------------------------------------------------------
# Single fused kernel: chunk-sum + folded l1 -> multi-head attention (with the
# torch layout quirk) -> attention tail (LN / Linear / LN) -> l2 -> folded l3.
# ----------------------------------------------------------------------------
def _fused_kernel(drug_ref, side_ref, qa_ref, wmix_ref, vec_ref, out_ref,
                  *, heads, latent, feature, drugs_dim, sides_dim,
                  drug_chunks, side_chunks):
    n = drug_ref.shape[0]
    dh = latent // heads
    per_row = latent // n
    scale = 1.0 / float(np.sqrt(dh))

    # ---- unpack the packed parameter slabs (static VMEM slices) ----
    wqkv = qa_ref[:, 0:3 * latent]                               # (latent, 3*latent)
    wa = qa_ref[:, 3 * latent:4 * latent]                        # (latent, latent)

    w1d = wmix_ref[:, 0:latent]                                  # (drugs_dim, latent)
    w1s = wmix_ref[0:sides_dim, latent:2 * latent]               # (sides_dim, latent)
    w3a = wmix_ref[sides_dim:sides_dim + feature, latent:2 * latent]   # (feature, latent)
    w2 = wmix_ref[:, 2 * latent:2 * latent + feature]            # (latent, feature)
    w3b = wmix_ref[:, 2 * latent + feature:
                   2 * latent + feature + drugs_dim + sides_dim]  # (latent, drugs+sides)

    b1 = vec_ref[0:1, 0:latent]        # l1 bias with BN1 folded in
    ln1g = vec_ref[1:2, 0:latent]
    ln1b = vec_ref[2:3, 0:latent]
    ba = vec_ref[3:4, 0:latent]
    ln2g = vec_ref[4:5, 0:latent]
    ln2b = vec_ref[5:6, 0:latent]
    b3a = vec_ref[6:7, 0:latent]       # l3 first bias with BN3 folded in
    b2 = vec_ref[7:8, 0:feature]
    b3b = vec_ref[7:8, feature:feature + drugs_dim + sides_dim]

    # ---- l1: in-kernel chunk sums (cheap VPU adds, no tiled weights) + Linear (BN folded) ----
    drugs = drug_ref[:, 0:drugs_dim]
    for k in range(1, drug_chunks):
        drugs = drugs + drug_ref[:, k * drugs_dim:(k + 1) * drugs_dim]
    sides = side_ref[:, 0:sides_dim]
    for k in range(1, side_chunks):
        sides = sides + side_ref[:, k * sides_dim:(k + 1) * sides_dim]

    x = (jnp.dot(drugs, w1d, preferred_element_type=jnp.float32)
         + jnp.dot(sides, w1s, preferred_element_type=jnp.float32)
         + b1)
    x = _leaky_relu(x)                                           # Dropout == identity (eval)

    # ---- attention: one fused QKV matmul, per-head scaled dot-product ----
    qkv = jnp.dot(x, wqkv, preferred_element_type=jnp.float32)   # (n, 3*latent)

    head_t = []
    for h in range(heads):
        qh = qkv[:, h * dh:(h + 1) * dh]
        kh = qkv[:, latent + h * dh:latent + (h + 1) * dh]
        vh = qkv[:, 2 * latent + h * dh:2 * latent + (h + 1) * dh]
        s = jnp.dot(qh, kh.T, preferred_element_type=jnp.float32) * scale
        s = s - jnp.max(s, axis=-1, keepdims=True)
        e = jnp.exp(s)
        p = e * pl.reciprocal(jnp.sum(e, axis=-1, keepdims=True), approx=True)
        a = jnp.dot(p, vh, preferred_element_type=jnp.float32)   # (n, dh)
        head_t.append(a.T)                                       # (dh, n)
    t_mat = jnp.concatenate(head_t, axis=0)                      # (latent, n)

    # torch quirk  att.transpose(1,2).reshape(-1, heads*dv):  its flat order is exactly the
    # row-major flatten of t_mat, i.e.  att[i, m*n + j] = t_mat[per_row*i + m, j].
    # Realized as `per_row` tiny 0/1-selection matmuls (MXU is idle) instead of 32 slice/concats.
    row_i = jax.lax.broadcasted_iota(jnp.int32, (n, latent), 0)
    col_r = jax.lax.broadcasted_iota(jnp.int32, (n, latent), 1)
    blocks = []
    for m in range(per_row):
        sel = jnp.where(col_r == per_row * row_i + m, 1.0, 0.0)  # (n, latent), exact 0/1
        blocks.append(jnp.dot(sel, t_mat, preferred_element_type=jnp.float32))   # (n, n)
    att = jnp.concatenate(blocks, axis=1)                        # (n, latent)

    # ---- attention tail: LN1 -> Linear -> LN2 ----
    x1 = _layernorm(att + x, ln1g, ln1b)
    out_a = jnp.dot(x1, wa, preferred_element_type=jnp.float32) + ba
    x2 = _layernorm(out_a + x1, ln2g, ln2b)

    # ---- l2 ----
    x3 = jnp.dot(x2, w2, preferred_element_type=jnp.float32) + b2

    # ---- l3: Linear -> BN(eval, folded) -> LeakyReLU -> Linear ----
    r = _leaky_relu(jnp.dot(x3, w3a, preferred_element_type=jnp.float32) + b3a)
    rec = jnp.dot(r, w3b, preferred_element_type=jnp.float32) + b3b

    # one lane-dense (n, 128) output slab: [x3 | rec | 0-pad]; split in the wrapper.
    pad = jnp.zeros((n, out_ref.shape[1] - (feature + drugs_dim + sides_dim)), jnp.float32)
    out_ref[...] = jnp.concatenate([x3, rec, pad], axis=1)


def _vmem_spec():
    return pl.BlockSpec(memory_space=pltpu.MemorySpace.VMEM)


def prepare_params(p):
    """One-time parameter folding & packing (run OUTSIDE the per-call jitted path)."""
    s1 = p["bn1g"] / jnp.sqrt(p["bn1v"] + BN_EPS)        # eval-mode BN1 affine (real running stats)
    s3 = p["bn3g"] / jnp.sqrt(p["bn3v"] + BN_EPS)        # eval-mode BN3 affine
    b1_eff = p["b1"] * s1 + (p["bn1b"] - p["bn1m"] * s1)
    b3a_eff = p["b3a"] * s3 + (p["bn3b"] - p["bn3m"] * s3)
    w1d_eff = p["w1d"] * s1
    w1s_eff = p["w1s"] * s1
    w3a_eff = p["w3a"] * s3

    qa = jnp.concatenate([p["wq"], p["wk"], p["wv"], p["wa"]], axis=1)         # (32, 128)
    wmix = jnp.concatenate([
        w1d_eff,                                           # (32, 32)
        jnp.concatenate([w1s_eff, w3a_eff], axis=0),       # (32, 32)
        p["w2"],                                           # (32, 16)
        p["w3b"],                                          # (32, 48)
    ], axis=1)                                             # (32, 128)

    def row128(v):
        return jnp.pad(v, ((0, 0), (0, 128 - v.shape[1])))

    vec_rows = [b1_eff, p["ln1g"], p["ln1b"], p["ba"], p["ln2g"], p["ln2b"], b3a_eff,
                jnp.concatenate([p["b2"], p["b3b"]], axis=1)]
    vecs = jnp.concatenate([row128(v) for v in vec_rows], axis=0)              # (8, 128)
    return {"qa": qa, "wmix": wmix, "vecs": vecs}


def encoder_addition_forward(drug, side, packed):
    """Jitted forward: one pallas_call + output split. `packed` comes from prepare_params()."""
    n = drug.shape[0]
    if LATENT_DIM % n != 0:
        # TODO(synk): general batch sizes need the transpose+reshape relayout or a batch grid.
        raise NotImplementedError("batch size must divide latent_dim for the fused kernel")

    kernel = functools.partial(
        _fused_kernel, heads=HEADS, latent=LATENT_DIM, feature=FEATURE_DIM,
        drugs_dim=DRUGS_DIM, sides_dim=SIDES_DIM,
        drug_chunks=DRUG_CHUNKS, side_chunks=SIDE_CHUNKS)

    matmul_cols = (LATENT_DIM + LATENT_DIM + 3 * LATENT_DIM + LATENT_DIM
                   + FEATURE_DIM + LATENT_DIM + DRUGS_DIM + SIDES_DIM)
    flops = (2 * n * LATENT_DIM * matmul_cols
             + 4 * HEADS * n * n * (LATENT_DIM // HEADS)
             + 2 * (LATENT_DIM // n) * n * LATENT_DIM * n)
    bytes_accessed = 4 * (drug.size + side.size + 2 * 32 * 128 + 8 * 128 + n * OUT_PAD)
    cost = pl.CostEstimate(flops=int(flops),
                           transcendentals=int(HEADS * n * n + 8 * n),
                           bytes_accessed=int(bytes_accessed))

    out = pl.pallas_call(
        kernel,
        out_shape=jax.ShapeDtypeStruct((n, OUT_PAD), jnp.float32),
        in_specs=[_vmem_spec()] * 5,
        out_specs=_vmem_spec(),
        cost_estimate=cost,
    )(drug, side, packed["qa"], packed["wmix"], packed["vecs"])

    return out[:, :FEATURE_DIM], out[:, FEATURE_DIM:FEATURE_DIM + DRUGS_DIM + SIDES_DIM]


# ----------------------------------------------------------------------------
# Pure-JAX reference that mirrors the PyTorch forward (eval mode) 1:1.
# ----------------------------------------------------------------------------
def reference_forward(drug, side, p):
    n = drug.shape[0]
    dh = LATENT_DIM // HEADS
    drugs = drug.reshape(n, DRUG_CHUNKS, DRUGS_DIM).sum(axis=1)
    sides = side.reshape(n, SIDE_CHUNKS, SIDES_DIM).sum(axis=1)
    s1 = p["bn1g"] / jnp.sqrt(p["bn1v"] + BN_EPS)
    s3 = p["bn3g"] / jnp.sqrt(p["bn3v"] + BN_EPS)

    x = drugs @ p["w1d"] + sides @ p["w1s"] + p["b1"]
    x = (x - p["bn1m"]) * s1 + p["bn1b"]
    x = _leaky_relu(x)

    q = (x @ p["wq"]).reshape(n, HEADS, dh).transpose(1, 0, 2)
    k = (x @ p["wk"]).reshape(n, HEADS, dh).transpose(1, 0, 2)
    v = (x @ p["wv"]).reshape(n, HEADS, dh).transpose(1, 0, 2)
    qk = jnp.matmul(q, jnp.swapaxes(k, -1, -2)) / np.sqrt(dh)
    qk = jax.nn.softmax(qk, axis=-1)
    att = jnp.matmul(qk, v)                                      # (heads, N, dv)
    att = jnp.transpose(att, (0, 2, 1)).reshape(n, HEADS * dh)   # torch .transpose(1,2).reshape

    x1 = _layernorm(att + x, p["ln1g"], p["ln1b"])
    out = x1 @ p["wa"] + p["ba"]
    x2 = _layernorm(out + x1, p["ln2g"], p["ln2b"])

    x3 = x2 @ p["w2"] + p["b2"]
    r = x3 @ p["w3a"] + p["b3a"]
    r = (r - p["bn3m"]) * s3 + p["bn3b"]
    r = _leaky_relu(r)
    rec = r @ p["w3b"] + p["b3b"]
    return x3, rec


if __name__ == "__main__":
    N = 8  # batch; also the "sequence length" of the Attention block

    key = jax.random.PRNGKey(0)
    keys = jax.random.split(key, 26)

    def nrm(k, shape, scale=0.1):
        return (scale * jax.random.normal(k, shape)).astype(jnp.float32)

    drug_features = nrm(keys[0], (N, DRUG_CHUNKS * DRUGS_DIM), 1.0)
    side_features = nrm(keys[1], (N, SIDE_CHUNKS * SIDES_DIM), 1.0)

    params = {
        # l1: Linear(DRUGS+SIDES -> LATENT) split into drug/side halves, BN affine + running stats
        "w1d": nrm(keys[2], (DRUGS_DIM, LATENT_DIM)),
        "w1s": nrm(keys[3], (SIDES_DIM, LATENT_DIM)),
        "b1": nrm(keys[4], (1, LATENT_DIM)),
        "bn1g": 1.0 + nrm(keys[5], (1, LATENT_DIM)),
        "bn1b": nrm(keys[6], (1, LATENT_DIM)),
        "bn1m": jnp.zeros((1, LATENT_DIM), jnp.float32),   # fresh running stats (eval)
        "bn1v": jnp.ones((1, LATENT_DIM), jnp.float32),
        # attention
        "wq": nrm(keys[7], (LATENT_DIM, LATENT_DIM)),
        "wk": nrm(keys[8], (LATENT_DIM, LATENT_DIM)),
        "wv": nrm(keys[9], (LATENT_DIM, LATENT_DIM)),
        "ln1g": 1.0 + nrm(keys[10], (1, LATENT_DIM)),
        "ln1b": nrm(keys[11], (1, LATENT_DIM)),
        "wa": nrm(keys[12], (LATENT_DIM, LATENT_DIM)),
        "ba": nrm(keys[13], (1, LATENT_DIM)),
        "ln2g": 1.0 + nrm(keys[14], (1, LATENT_DIM)),
        "ln2b": nrm(keys[15], (1, LATENT_DIM)),
        # l2
        "w2": nrm(keys[16], (LATENT_DIM, FEATURE_DIM)),
        "b2": nrm(keys[17], (1, FEATURE_DIM)),
        # l3
        "w3a": nrm(keys[18], (FEATURE_DIM, LATENT_DIM)),
        "b3a": nrm(keys[19], (1, LATENT_DIM)),
        "bn3g": 1.0 + nrm(keys[20], (1, LATENT_DIM)),
        "bn3b": nrm(keys[21], (1, LATENT_DIM)),
        "bn3m": jnp.zeros((1, LATENT_DIM), jnp.float32),
        "bn3v": jnp.ones((1, LATENT_DIM), jnp.float32),
        "w3b": nrm(keys[22], (LATENT_DIM, DRUGS_DIM + SIDES_DIM)),
        "b3b": nrm(keys[23], (1, DRUGS_DIM + SIDES_DIM)),
    }

    packed = prepare_params(params)        # one-time folding & packing, outside the jitted path
    fwd = jax.jit(encoder_addition_forward)
    x_out, rec_add = jax.block_until_ready(fwd(drug_features, side_features, packed))

    assert x_out.shape == (N, FEATURE_DIM)
    assert rec_add.shape == (N, DRUGS_DIM + SIDES_DIM)

    x_ref, rec_ref = reference_forward(drug_features, side_features, params)
    if not (np.allclose(np.asarray(x_out), np.asarray(x_ref), atol=2e-2, rtol=2e-2)
            and np.allclose(np.asarray(rec_add), np.asarray(rec_ref), atol=2e-2, rtol=2e-2)):
        raise AssertionError("Pallas kernel output does not match JAX reference")

    print("KERNEL_OK")
</pallas_src>

<mosaic_0001>
module attributes {stable_mosaic.version = 11 : i64} {
  func.func @_fused_kernel(%arg0: memref<8x352xf32, #tpu.memory_space<vmem>>, %arg1: memref<8x64xf32, #tpu.memory_space<vmem>>, %arg2: memref<32x128xf32, #tpu.memory_space<vmem>>, %arg3: memref<32x128xf32, #tpu.memory_space<vmem>>, %arg4: memref<8x128xf32, #tpu.memory_space<vmem>>, %arg5: memref<8x128xf32, #tpu.memory_space<vmem>>) attributes {dimension_semantics = [], scalar_prefetch = 0 : i64, scratch_operands = 0 : i64, tpu.core_type = #tpu.core_type<tc>} {
    %c0 = arith.constant 0 : index
    %c0_0 = arith.constant 0 : index
    %0 = vector.load %arg2[%c0, %c0_0] : memref<32x128xf32, #tpu.memory_space<vmem>>, vector<32x96xf32>
    %c0_1 = arith.constant 0 : index
    %c96 = arith.constant 96 : index
    %1 = vector.load %arg2[%c0_1, %c96] : memref<32x128xf32, #tpu.memory_space<vmem>>, vector<32x32xf32>
    %c0_2 = arith.constant 0 : index
    %c0_3 = arith.constant 0 : index
    %2 = vector.load %arg3[%c0_2, %c0_3] : memref<32x128xf32, #tpu.memory_space<vmem>>, vector<32x32xf32>
    %c0_4 = arith.constant 0 : index
    %c32 = arith.constant 32 : index
    %3 = vector.load %arg3[%c0_4, %c32] : memref<32x128xf32, #tpu.memory_space<vmem>>, vector<16x32xf32>
    %c16 = arith.constant 16 : index
    %c32_5 = arith.constant 32 : index
    %4 = vector.load %arg3[%c16, %c32_5] : memref<32x128xf32, #tpu.memory_space<vmem>>, vector<16x32xf32>
    %c0_6 = arith.constant 0 : index
    %c64 = arith.constant 64 : index
    %5 = vector.load %arg3[%c0_6, %c64] : memref<32x128xf32, #tpu.memory_space<vmem>>, vector<32x16xf32>
    %c0_7 = arith.constant 0 : index
    %c80 = arith.constant 80 : index
    %6 = vector.load %arg3[%c0_7, %c80] : memref<32x128xf32, #tpu.memory_space<vmem>>, vector<32x48xf32>
    %c0_8 = arith.constant 0 : index
    %c0_9 = arith.constant 0 : index
    %7 = vector.load %arg4[%c0_8, %c0_9] : memref<8x128xf32, #tpu.memory_space<vmem>>, vector<1x32xf32>
    %c1 = arith.constant 1 : index
    %c0_10 = arith.constant 0 : index
    %8 = vector.load %arg4[%c1, %c0_10] : memref<8x128xf32, #tpu.memory_space<vmem>>, vector<1x32xf32>
    %c2 = arith.constant 2 : index
    %c0_11 = arith.constant 0 : index
    %9 = vector.load %arg4[%c2, %c0_11] : memref<8x128xf32, #tpu.memory_space<vmem>>, vector<1x32xf32>
    %c3 = arith.constant 3 : index
    %c0_12 = arith.constant 0 : index
    %10 = vector.load %arg4[%c3, %c0_12] : memref<8x128xf32, #tpu.memory_space<vmem>>, vector<1x32xf32>
    %c4 = arith.constant 4 : index
    %c0_13 = arith.constant 0 : index
    %11 = vector.load %arg4[%c4, %c0_13] : memref<8x128xf32, #tpu.memory_space<vmem>>, vector<1x32xf32>
    %c5 = arith.constant 5 : index
    %c0_14 = arith.constant 0 : index
    %12 = vector.load %arg4[%c5, %c0_14] : memref<8x128xf32, #tpu.memory_space<vmem>>, vector<1x32xf32>
    %c6 = arith.constant 6 : index
    %c0_15 = arith.constant 0 : index
    %13 = vector.load %arg4[%c6, %c0_15] : memref<8x128xf32, #tpu.memory_space<vmem>>, vector<1x32xf32>
    %c7 = arith.constant 7 : index
    %c0_16 = arith.constant 0 : index
    %14 = vector.load %arg4[%c7, %c0_16] : memref<8x128xf32, #tpu.memory_space<vmem>>, vector<1x16xf32>
    %c7_17 = arith.constant 7 : index
    %c16_18 = arith.constant 16 : index
    %15 = vector.load %arg4[%c7_17, %c16_18] : memref<8x128xf32, #tpu.memory_space<vmem>>, vector<1x48xf32>
    %c0_19 = arith.constant 0 : index
    %c0_20 = arith.constant 0 : index
    %16 = vector.load %arg0[%c0_19, %c0_20] : memref<8x352xf32, #tpu.memory_space<vmem>>, vector<8x32xf32>
    %c0_21 = arith.constant 0 : index
    %c32_22 = arith.constant 32 : index
    %17 = vector.load %arg0[%c0_21, %c32_22] : memref<8x352xf32, #tpu.memory_space<vmem>>, vector<8x32xf32>
    %18 = arith.addf %16, %17 : vector<8x32xf32>
    %c0_23 = arith.constant 0 : index
    %c64_24 = arith.constant 64 : index
    %19 = vector.load %arg0[%c0_23, %c64_24] : memref<8x352xf32, #tpu.memory_space<vmem>>, vector<8x32xf32>
    %20 = arith.addf %18, %19 : vector<8x32xf32>
    %c0_25 = arith.constant 0 : index
    %c96_26 = arith.constant 96 : index
    %21 = vector.load %arg0[%c0_25, %c96_26] : memref<8x352xf32, #tpu.memory_space<vmem>>, vector<8x32xf32>
    %22 = arith.addf %20, %21 : vector<8x32xf32>
    %c0_27 = arith.constant 0 : index
    %c128 = arith.constant 128 : index
    %23 = vector.load %arg0[%c0_27, %c128] : memref<8x352xf32, #tpu.memory_space<vmem>>, vector<8x32xf32>
    %24 = arith.addf %22, %23 : vector<8x32xf32>
    %c0_28 = arith.constant 0 : index
    %c160 = arith.constant 160 : index
    %25 = vector.load %arg0[%c0_28, %c160] : memref<8x352xf32, #tpu.memory_space<vmem>>, vector<8x32xf32>
    %26 = arith.addf %24, %25 : vector<8x32xf32>
    %c0_29 = arith.constant 0 : index
    %c192 = arith.constant 192 : index
    %27 = vector.load %arg0[%c0_29, %c192] : memref<8x352xf32, #tpu.memory_space<vmem>>, vector<8x32xf32>
    %28 = arith.addf %26, %27 : vector<8x32xf32>
    %c0_30 = arith.constant 0 : index
    %c224 = arith.constant 224 : index
    %29 = vector.load %arg0[%c0_30, %c224] : memref<8x352xf32, #tpu.memory_space<vmem>>, vector<8x32xf32>
    %30 = arith.addf %28, %29 : vector<8x32xf32>
    %c0_31 = arith.constant 0 : index
    %c256 = arith.constant 256 : index
    %31 = vector.load %arg0[%c0_31, %c256] : memref<8x352xf32, #tpu.memory_space<vmem>>, vector<8x32xf32>
    %32 = arith.addf %30, %31 : vector<8x32xf32>
    %c0_32 = arith.constant 0 : index
    %c288 = arith.constant 288 : index
    %33 = vector.load %arg0[%c0_32, %c288] : memref<8x352xf32, #tpu.memory_space<vmem>>, vector<8x32xf32>
    %34 = arith.addf %32, %33 : vector<8x32xf32>
    %c0_33 = arith.constant 0 : index
    %c320 = arith.constant 320 : index
    %35 = vector.load %arg0[%c0_33, %c320] : memref<8x352xf32, #tpu.memory_space<vmem>>, vector<8x32xf32>
    %36 = arith.addf %34, %35 : vector<8x32xf32>
    %c0_34 = arith.constant 0 : index
    %c0_35 = arith.constant 0 : index
    %37 = vector.load %arg1[%c0_34, %c0_35] : memref<8x64xf32, #tpu.memory_space<vmem>>, vector<8x16xf32>
    %c0_36 = arith.constant 0 : index
    %c16_37 = arith.constant 16 : index
    %38 = vector.load %arg1[%c0_36, %c16_37] : memref<8x64xf32, #tpu.memory_space<vmem>>, vector<8x16xf32>
    %39 = arith.addf %37, %38 : vector<8x16xf32>
    %c0_38 = arith.constant 0 : index
    %c32_39 = arith.constant 32 : index
    %40 = vector.load %arg1[%c0_38, %c32_39] : memref<8x64xf32, #tpu.memory_space<vmem>>, vector<8x16xf32>
    %41 = arith.addf %39, %40 : vector<8x16xf32>
    %c0_40 = arith.constant 0 : index
    %c48 = arith.constant 48 : index
    %42 = vector.load %arg1[%c0_40, %c48] : memref<8x64xf32, #tpu.memory_space<vmem>>, vector<8x16xf32>
    %43 = arith.addf %41, %42 : vector<8x16xf32>
    %cst = arith.constant dense<0.000000e+00> : vector<8x32xf32>
    %44 = tpu.matmul %36, %2, %cst {dimension_numbers = #tpu.dot_dimension_numbers<[1], [0], [0], [1], [0, 0, 1, 1], [], []>} : vector<8x32xf32>, vector<32x32xf32>, vector<8x32xf32> -> vector<8x32xf32>
    %cst_41 = arith.constant dense<0.000000e+00> : vector<8x32xf32>
    %45 = tpu.matmul %43, %3, %cst_41 {dimension_numbers = #tpu.dot_dimension_numbers<[1], [0], [0], [1], [0, 0, 1, 1], [], []>} : vector<8x16xf32>, vector<16x32xf32>, vector<8x32xf32> -> vector<8x32xf32>
    %46 = arith.addf %44, %45 : vector<8x32xf32>
    %47 = vector.broadcast %7 : vector<1x32xf32> to vector<8x32xf32>
    %48 = arith.addf %46, %47 : vector<8x32xf32>
    %cst_42 = arith.constant 0.000000e+00 : f32
    %49 = vector.broadcast %cst_42 : f32 to vector<8x32xf32>
    %50 = arith.cmpf oge, %48, %49 : vector<8x32xf32>
    %cst_43 = arith.constant 0.00999999977 : f32
    %51 = vector.broadcast %cst_43 : f32 to vector<8x32xf32>
    %52 = arith.mulf %51, %48 : vector<8x32xf32>
    %53 = arith.select %50, %48, %52 : vector<8x32xi1>, vector<8x32xf32>
    %cst_44 = arith.constant dense<0.000000e+00> : vector<8x96xf32>
    %54 = tpu.matmul %53, %0, %cst_44 {dimension_numbers = #tpu.dot_dimension_numbers<[1], [0], [0], [1], [0, 0, 1, 1], [], []>} : vector<8x32xf32>, vector<32x96xf32>, vector<8x96xf32> -> vector<8x96xf32>
    %55 = vector.extract_strided_slice %54 {offsets = [0, 0], sizes = [8, 8], strides = [1, 1]} : vector<8x96xf32> to vector<8x8xf32>
    %56 = vector.extract_strided_slice %54 {offsets = [0, 32], sizes = [8, 8], strides = [1, 1]} : vector<8x96xf32> to vector<8x8xf32>
    %57 = vector.extract_strided_slice %54 {offsets = [0, 64], sizes = [8, 8], strides = [1, 1]} : vector<8x96xf32> to vector<8x8xf32>
    %58 = tpu.transpose %56, [1, 0] : vector<8x8xf32> -> vector<8x8xf32>
    %cst_45 = arith.constant dense<0.000000e+00> : vector<8x8xf32>
    %59 = tpu.matmul %55, %58, %cst_45 {dimension_numbers = #tpu.dot_dimension_numbers<[1], [0], [0], [1], [0, 0, 1, 1], [], []>} : vector<8x8xf32>, vector<8x8xf32>, vector<8x8xf32> -> vector<8x8xf32>
    %cst_46 = arith.constant 0.353553385 : f32
    %60 = vector.broadcast %cst_46 : f32 to vector<8x8xf32>
    %61 = arith.mulf %59, %60 : vector<8x8xf32>
    %cst_47 = arith.constant dense<0xFF800000> : vector<8xf32>
    %62 = vector.multi_reduction <maximumf>, %61, %cst_47 [1] : vector<8x8xf32> to vector<8xf32>
    %63 = vector.shape_cast %62 : vector<8xf32> to vector<8x1xf32>
    %64 = vector.broadcast %63 : vector<8x1xf32> to vector<8x8xf32>
    %65 = arith.subf %61, %64 : vector<8x8xf32>
    %66 = math.exp %65 : vector<8x8xf32>
    %cst_48 = arith.constant dense<0.000000e+00> : vector<8xf32>
    %67 = vector.multi_reduction <add>, %66, %cst_48 [1] : vector<8x8xf32> to vector<8xf32>
    %68 = vector.shape_cast %67 : vector<8xf32> to vector<8x1xf32>
    %69 = tpu.reciprocal %68 {approx = true} : vector<8x1xf32> -> vector<8x1xf32>
    %70 = vector.broadcast %69 : vector<8x1xf32> to vector<8x8xf32>
    %71 = arith.mulf %66, %70 : vector<8x8xf32>
    %cst_49 = arith.constant dense<0.000000e+00> : vector<8x8xf32>
    %72 = tpu.matmul %71, %57, %cst_49 {dimension_numbers = #tpu.dot_dimension_numbers<[1], [0], [0], [1], [0, 0, 1, 1], [], []>} : vector<8x8xf32>, vector<8x8xf32>, vector<8x8xf32> -> vector<8x8xf32>
    %73 = tpu.transpose %72, [1, 0] : vector<8x8xf32> -> vector<8x8xf32>
    %74 = vector.extract_strided_slice %54 {offsets = [0, 8], sizes = [8, 8], strides = [1, 1]} : vector<8x96xf32> to vector<8x8xf32>
    %75 = vector.extract_strided_slice %54 {offsets = [0, 40], sizes = [8, 8], strides = [1, 1]} : vector<8x96xf32> to vector<8x8xf32>
    %76 = vector.extract_strided_slice %54 {offsets = [0, 72], sizes = [8, 8], strides = [1, 1]} : vector<8x96xf32> to vector<8x8xf32>
    %77 = tpu.transpose %75, [1, 0] : vector<8x8xf32> -> vector<8x8xf32>
    %cst_50 = arith.constant dense<0.000000e+00> : vector<8x8xf32>
    %78 = tpu.matmul %74, %77, %cst_50 {dimension_numbers = #tpu.dot_dimension_numbers<[1], [0], [0], [1], [0, 0, 1, 1], [], []>} : vector<8x8xf32>, vector<8x8xf32>, vector<8x8xf32> -> vector<8x8xf32>
    %cst_51 = arith.constant 0.353553385 : f32
    %79 = vector.broadcast %cst_51 : f32 to vector<8x8xf32>
    %80 = arith.mulf %78, %79 : vector<8x8xf32>
    %cst_52 = arith.constant dense<0xFF800000> : vector<8xf32>
    %81 = vector.multi_reduction <maximumf>, %80, %cst_52 [1] : vector<8x8xf32> to vector<8xf32>
    %82 = vector.shape_cast %81 : vector<8xf32> to vector<8x1xf32>
    %83 = vector.broadcast %82 : vector<8x1xf32> to vector<8x8xf32>
    %84 = arith.subf %80, %83 : vector<8x8xf32>
    %85 = math.exp %84 : vector<8x8xf32>
    %cst_53 = arith.constant dense<0.000000e+00> : vector<8xf32>
    %86 = vector.multi_reduction <add>, %85, %cst_53 [1] : vector<8x8xf32> to vector<8xf32>
    %87 = vector.shape_cast %86 : vector<8xf32> to vector<8x1xf32>
    %88 = tpu.reciprocal %87 {approx = true} : vector<8x1xf32> -> vector<8x1xf32>
    %89 = vector.broadcast %88 : vector<8x1xf32> to vector<8x8xf32>
    %90 = arith.mulf %85, %89 : vector<8x8xf32>
    %cst_54 = arith.constant dense<0.000000e+00> : vector<8x8xf32>
    %91 = tpu.matmul %90, %76, %cst_54 {dimension_numbers = #tpu.dot_dimension_numbers<[1], [0], [0], [1], [0, 0, 1, 1], [], []>} : vector<8x8xf32>, vector<8x8xf32>, vector<8x8xf32> -> vector<8x8xf32>
    %92 = tpu.transpose %91, [1, 0] : vector<8x8xf32> -> vector<8x8xf32>
    %93 = vector.extract_strided_slice %54 {offsets = [0, 16], sizes = [8, 8], strides = [1, 1]} : vector<8x96xf32> to vector<8x8xf32>
    %94 = vector.extract_strided_slice %54 {offsets = [0, 48], sizes = [8, 8], strides = [1, 1]} : vector<8x96xf32> to vector<8x8xf32>
    %95 = vector.extract_strided_slice %54 {offsets = [0, 80], sizes = [8, 8], strides = [1, 1]} : vector<8x96xf32> to vector<8x8xf32>
    %96 = tpu.transpose %94, [1, 0] : vector<8x8xf32> -> vector<8x8xf32>
    %cst_55 = arith.constant dense<0.000000e+00> : vector<8x8xf32>
    %97 = tpu.matmul %93, %96, %cst_55 {dimension_numbers = #tpu.dot_dimension_numbers<[1], [0], [0], [1], [0, 0, 1, 1], [], []>} : vector<8x8xf32>, vector<8x8xf32>, vector<8x8xf32> -> vector<8x8xf32>
    %cst_56 = arith.constant 0.353553385 : f32
    %98 = vector.broadcast %cst_56 : f32 to vector<8x8xf32>
    %99 = arith.mulf %97, %98 : vector<8x8xf32>
    %cst_57 = arith.constant dense<0xFF800000> : vector<8xf32>
    %100 = vector.multi_reduction <maximumf>, %99, %cst_57 [1] : vector<8x8xf32> to vector<8xf32>
    %101 = vector.shape_cast %100 : vector<8xf32> to vector<8x1xf32>
    %102 = vector.broadcast %101 : vector<8x1xf32> to vector<8x8xf32>
    %103 = arith.subf %99, %102 : vector<8x8xf32>
    %104 = math.exp %103 : vector<8x8xf32>
    %cst_58 = arith.constant dense<0.000000e+00> : vector<8xf32>
    %105 = vector.multi_reduction <add>, %104, %cst_58 [1] : vector<8x8xf32> to vector<8xf32>
    %106 = vector.shape_cast %105 : vector<8xf32> to vector<8x1xf32>
    %107 = tpu.reciprocal %106 {approx = true} : vector<8x1xf32> -> vector<8x1xf32>
    %108 = vector.broadcast %107 : vector<8x1xf32> to vector<8x8xf32>
    %109 = arith.mulf %104, %108 : vector<8x8xf32>
    %cst_59 = arith.constant dense<0.000000e+00> : vector<8x8xf32>
    %110 = tpu.matmul %109, %95, %cst_59 {dimension_numbers = #tpu.dot_dimension_numbers<[1], [0], [0], [1], [0, 0, 1, 1], [], []>} : vector<8x8xf32>, vector<8x8xf32>, vector<8x8xf32> -> vector<8x8xf32>
    %111 = tpu.transpose %110, [1, 0] : vector<8x8xf32> -> vector<8x8xf32>
    %112 = vector.extract_strided_slice %54 {offsets = [0, 24], sizes = [8, 8], strides = [1, 1]} : vector<8x96xf32> to vector<8x8xf32>
    %113 = vector.extract_strided_slice %54 {offsets = [0, 56], sizes = [8, 8], strides = [1, 1]} : vector<8x96xf32> to vector<8x8xf32>
    %114 = vector.extract_strided_slice %54 {offsets = [0, 88], sizes = [8, 8], strides = [1, 1]} : vector<8x96xf32> to vector<8x8xf32>
    %115 = tpu.transpose %113, [1, 0] : vector<8x8xf32> -> vector<8x8xf32>
    %cst_60 = arith.constant dense<0.000000e+00> : vector<8x8xf32>
    %116 = tpu.matmul %112, %115, %cst_60 {dimension_numbers = #tpu.dot_dimension_numbers<[1], [0], [0], [1], [0, 0, 1, 1], [], []>} : vector<8x8xf32>, vector<8x8xf32>, vector<8x8xf32> -> vector<8x8xf32>
    %cst_61 = arith.constant 0.353553385 : f32
    %117 = vector.broadcast %cst_61 : f32 to vector<8x8xf32>
    %118 = arith.mulf %116, %117 : vector<8x8xf32>
    %cst_62 = arith.constant dense<0xFF800000> : vector<8xf32>
    %119 = vector.multi_reduction <maximumf>, %118, %cst_62 [1] : vector<8x8xf32> to vector<8xf32>
    %120 = vector.shape_cast %119 : vector<8xf32> to vector<8x1xf32>
    %121 = vector.broadcast %120 : vector<8x1xf32> to vector<8x8xf32>
    %122 = arith.subf %118, %121 : vector<8x8xf32>
    %123 = math.exp %122 : vector<8x8xf32>
    %cst_63 = arith.constant dense<0.000000e+00> : vector<8xf32>
    %124 = vector.multi_reduction <add>, %123, %cst_63 [1] : vector<8x8xf32> to vector<8xf32>
    %125 = vector.shape_cast %124 : vector<8xf32> to vector<8x1xf32>
    %126 = tpu.reciprocal %125 {approx = true} : vector<8x1xf32> -> vector<8x1xf32>
    %127 = vector.broadcast %126 : vector<8x1xf32> to vector<8x8xf32>
    %128 = arith.mulf %123, %127 : vector<8x8xf32>
    %cst_64 = arith.constant dense<0.000000e+00> : vector<8x8xf32>
    %129 = tpu.matmul %128, %114, %cst_64 {dimension_numbers = #tpu.dot_dimension_numbers<[1], [0], [0], [1], [0, 0, 1, 1], [], []>} : vector<8x8xf32>, vector<8x8xf32>, vector<8x8xf32> -> vector<8x8xf32>
    %130 = tpu.transpose %129, [1, 0] : vector<8x8xf32> -> vector<8x8xf32>
    %131 = tpu.concatenate %73, %92, %111, %130 in 0 : vector<8x8xf32>, vector<8x8xf32>, vector<8x8xf32>, vector<8x8xf32> -> vector<32x8xf32>
    %132 = tpu.iota {dimensions = array<i32: 0>} : vector<8x32xi32>
    %133 = tpu.iota {dimensions = array<i32: 1>} : vector<8x32xi32>
    %c4_i32 = arith.constant 4 : i32
    %134 = vector.broadcast %c4_i32 : i32 to vector<8x32xi32>
    %135 = arith.muli %134, %132 : vector<8x32xi32>
    %c0_i32 = arith.constant 0 : i32
    %136 = vector.broadcast %c0_i32 : i32 to vector<8x32xi32>
    %137 = arith.addi %135, %136 : vector<8x32xi32>
    %138 = arith.cmpi eq, %133, %137 : vector<8x32xi32>
    %cst_65 = arith.constant 1.000000e+00 : f32
    %cst_66 = arith.constant 0.000000e+00 : f32
    %139 = vector.broadcast %cst_65 : f32 to vector<8x32xf32>
    %140 = vector.broadcast %cst_66 : f32 to vector<8x32xf32>
    %141 = arith.select %138, %139, %140 : vector<8x32xi1>, vector<8x32xf32>
    %cst_67 = arith.constant dense<0.000000e+00> : vector<8x8xf32>
    %142 = tpu.matmul %141, %131, %cst_67 {dimension_numbers = #tpu.dot_dimension_numbers<[1], [0], [0], [1], [0, 0, 1, 1], [], []>} : vector<8x32xf32>, vector<32x8xf32>, vector<8x8xf32> -> vector<8x8xf32>
    %c4_i32_68 = arith.constant 4 : i32
    %143 = vector.broadcast %c4_i32_68 : i32 to vector<8x32xi32>
    %144 = arith.muli %143, %132 : vector<8x32xi32>
    %c1_i32 = arith.constant 1 : i32
    %145 = vector.broadcast %c1_i32 : i32 to vector<8x32xi32>
    %146 = arith.addi %144, %145 : vector<8x32xi32>
    %147 = arith.cmpi eq, %133, %146 : vector<8x32xi32>
    %cst_69 = arith.constant 1.000000e+00 : f32
    %cst_70 = arith.constant 0.000000e+00 : f32
    %148 = vector.broadcast %cst_69 : f32 to vector<8x32xf32>
    %149 = vector.broadcast %cst_70 : f32 to vector<8x32xf32>
    %150 = arith.select %147, %148, %149 : vector<8x32xi1>, vector<8x32xf32>
    %cst_71 = arith.constant dense<0.000000e+00> : vector<8x8xf32>
    %151 = tpu.matmul %150, %131, %cst_71 {dimension_numbers = #tpu.dot_dimension_numbers<[1], [0], [0], [1], [0, 0, 1, 1], [], []>} : vector<8x32xf32>, vector<32x8xf32>, vector<8x8xf32> -> vector<8x8xf32>
    %c4_i32_72 = arith.constant 4 : i32
    %152 = vector.broadcast %c4_i32_72 : i32 to vector<8x32xi32>
    %153 = arith.muli %152, %132 : vector<8x32xi32>
    %c2_i32 = arith.constant 2 : i32
    %154 = vector.broadcast %c2_i32 : i32 to vector<8x32xi32>
    %155 = arith.addi %153, %154 : vector<8x32xi32>
    %156 = arith.cmpi eq, %133, %155 : vector<8x32xi32>
    %cst_73 = arith.constant 1.000000e+00 : f32
    %cst_74 = arith.constant 0.000000e+00 : f32
    %157 = vector.broadcast %cst_73 : f32 to vector<8x32xf32>
    %158 = vector.broadcast %cst_74 : f32 to vector<8x32xf32>
    %159 = arith.select %156, %157, %158 : vector<8x32xi1>, vector<8x32xf32>
    %cst_75 = arith.constant dense<0.000000e+00> : vector<8x8xf32>
    %160 = tpu.matmul %159, %131, %cst_75 {dimension_numbers = #tpu.dot_dimension_numbers<[1], [0], [0], [1], [0, 0, 1, 1], [], []>} : vector<8x32xf32>, vector<32x8xf32>, vector<8x8xf32> -> vector<8x8xf32>
    %c4_i32_76 = arith.constant 4 : i32
    %161 = vector.broadcast %c4_i32_76 : i32 to vector<8x32xi32>
    %162 = arith.muli %161, %132 : vector<8x32xi32>
    %c3_i32 = arith.constant 3 : i32
    %163 = vector.broadcast %c3_i32 : i32 to vector<8x32xi32>
    %164 = arith.addi %162, %163 : vector<8x32xi32>
    %165 = arith.cmpi eq, %133, %164 : vector<8x32xi32>
    %cst_77 = arith.constant 1.000000e+00 : f32
    %cst_78 = arith.constant 0.000000e+00 : f32
    %166 = vector.broadcast %cst_77 : f32 to vector<8x32xf32>
    %167 = vector.broadcast %cst_78 : f32 to vector<8x32xf32>
    %168 = arith.select %165, %166, %167 : vector<8x32xi1>, vector<8x32xf32>
    %cst_79 = arith.constant dense<0.000000e+00> : vector<8x8xf32>
    %169 = tpu.matmul %168, %131, %cst_79 {dimension_numbers = #tpu.dot_dimension_numbers<[1], [0], [0], [1], [0, 0, 1, 1], [], []>} : vector<8x32xf32>, vector<32x8xf32>, vector<8x8xf32> -> vector<8x8xf32>
    %170 = tpu.concatenate %142, %151, %160, %169 in 1 : vector<8x8xf32>, vector<8x8xf32>, vector<8x8xf32>, vector<8x8xf32> -> vector<8x32xf32>
    %171 = arith.addf %170, %53 : vector<8x32xf32>
    %cst_80 = arith.constant dense<0.000000e+00> : vector<8xf32>
    %172 = vector.multi_reduction <add>, %171, %cst_80 [1] : vector<8x32xf32> to vector<8xf32>
    %173 = vector.shape_cast %172 : vector<8xf32> to vector<8x1xf32>
    %cst_81 = arith.constant 3.200000e+01 : f32
    %174 = vector.broadcast %cst_81 : f32 to vector<8x1xf32>
    %175 = arith.divf %173, %174 : vector<8x1xf32>
    %176 = vector.broadcast %175 : vector<8x1xf32> to vector<8x32xf32>
    %177 = arith.subf %171, %176 : vector<8x32xf32>
    %178 = arith.mulf %177, %177 : vector<8x32xf32>
    %cst_82 = arith.constant dense<0.000000e+00> : vector<8xf32>
    %179 = vector.multi_reduction <add>, %178, %cst_82 [1] : vector<8x32xf32> to vector<8xf32>
    %180 = vector.shape_cast %179 : vector<8xf32> to vector<8x1xf32>
    %cst_83 = arith.constant 3.200000e+01 : f32
    %181 = vector.broadcast %cst_83 : f32 to vector<8x1xf32>
    %182 = arith.divf %180, %181 : vector<8x1xf32>
    %cst_84 = arith.constant 9.99999974E-6 : f32
    %183 = vector.broadcast %cst_84 : f32 to vector<8x1xf32>
    %184 = arith.addf %182, %183 : vector<8x1xf32>
    %185 = math.rsqrt %184 : vector<8x1xf32>
    %186 = vector.broadcast %185 : vector<8x1xf32> to vector<8x32xf32>
    %187 = arith.mulf %177, %186 : vector<8x32xf32>
    %188 = vector.broadcast %8 : vector<1x32xf32> to vector<8x32xf32>
    %189 = arith.mulf %187, %188 : vector<8x32xf32>
    %190 = vector.broadcast %9 : vector<1x32xf32> to vector<8x32xf32>
    %191 = arith.addf %189, %190 : vector<8x32xf32>
    %cst_85 = arith.constant dense<0.000000e+00> : vector<8x32xf32>
    %192 = tpu.matmul %191, %1, %cst_85 {dimension_numbers = #tpu.dot_dimension_numbers<[1], [0], [0], [1], [0, 0, 1, 1], [], []>} : vector<8x32xf32>, vector<32x32xf32>, vector<8x32xf32> -> vector<8x32xf32>
    %193 = vector.broadcast %10 : vector<1x32xf32> to vector<8x32xf32>
    %194 = arith.addf %192, %193 : vector<8x32xf32>
    %195 = arith.addf %194, %191 : vector<8x32xf32>
    %cst_86 = arith.constant dense<0.000000e+00> : vector<8xf32>
    %196 = vector.multi_reduction <add>, %195, %cst_86 [1] : vector<8x32xf32> to vector<8xf32>
    %197 = vector.shape_cast %196 : vector<8xf32> to vector<8x1xf32>
    %cst_87 = arith.constant 3.200000e+01 : f32
    %198 = vector.broadcast %cst_87 : f32 to vector<8x1xf32>
    %199 = arith.divf %197, %198 : vector<8x1xf32>
    %200 = vector.broadcast %199 : vector<8x1xf32> to vector<8x32xf32>
    %201 = arith.subf %195, %200 : vector<8x32xf32>
    %202 = arith.mulf %201, %201 : vector<8x32xf32>
    %cst_88 = arith.constant dense<0.000000e+00> : vector<8xf32>
    %203 = vector.multi_reduction <add>, %202, %cst_88 [1] : vector<8x32xf32> to vector<8xf32>
    %204 = vector.shape_cast %203 : vector<8xf32> to vector<8x1xf32>
    %cst_89 = arith.constant 3.200000e+01 : f32
    %205 = vector.broadcast %cst_89 : f32 to vector<8x1xf32>
    %206 = arith.divf %204, %205 : vector<8x1xf32>
    %cst_90 = arith.constant 9.99999974E-6 : f32
    %207 = vector.broadcast %cst_90 : f32 to vector<8x1xf32>
    %208 = arith.addf %206, %207 : vector<8x1xf32>
    %209 = math.rsqrt %208 : vector<8x1xf32>
    %210 = vector.broadcast %209 : vector<8x1xf32> to vector<8x32xf32>
    %211 = arith.mulf %201, %210 : vector<8x32xf32>
    %212 = vector.broadcast %11 : vector<1x32xf32> to vector<8x32xf32>
    %213 = arith.mulf %211, %212 : vector<8x32xf32>
    %214 = vector.broadcast %12 : vector<1x32xf32> to vector<8x32xf32>
    %215 = arith.addf %213, %214 : vector<8x32xf32>
    %cst_91 = arith.constant dense<0.000000e+00> : vector<8x16xf32>
    %216 = tpu.matmul %215, %5, %cst_91 {dimension_numbers = #tpu.dot_dimension_numbers<[1], [0], [0], [1], [0, 0, 1, 1], [], []>} : vector<8x32xf32>, vector<32x16xf32>, vector<8x16xf32> -> vector<8x16xf32>
    %217 = vector.broadcast %14 : vector<1x16xf32> to vector<8x16xf32>
    %218 = arith.addf %216, %217 : vector<8x16xf32>
    %cst_92 = arith.constant dense<0.000000e+00> : vector<8x32xf32>
    %219 = tpu.matmul %218, %4, %cst_92 {dimension_numbers = #tpu.dot_dimension_numbers<[1], [0], [0], [1], [0, 0, 1, 1], [], []>} : vector<8x16xf32>, vector<16x32xf32>, vector<8x32xf32> -> vector<8x32xf32>
    %220 = vector.broadcast %13 : vector<1x32xf32> to vector<8x32xf32>
    %221 = arith.addf %219, %220 : vector<8x32xf32>
    %cst_93 = arith.constant 0.000000e+00 : f32
    %222 = vector.broadcast %cst_93 : f32 to vector<8x32xf32>
    %223 = arith.cmpf oge, %221, %222 : vector<8x32xf32>
    %cst_94 = arith.constant 0.00999999977 : f32
    %224 = vector.broadcast %cst_94 : f32 to vector<8x32xf32>
    %225 = arith.mulf %224, %221 : vector<8x32xf32>
    %226 = arith.select %223, %221, %225 : vector<8x32xi1>, vector<8x32xf32>
    %cst_95 = arith.constant dense<0.000000e+00> : vector<8x48xf32>
    %227 = tpu.matmul %226, %6, %cst_95 {dimension_numbers = #tpu.dot_dimension_numbers<[1], [0], [0], [1], [0, 0, 1, 1], [], []>} : vector<8x32xf32>, vector<32x48xf32>, vector<8x48xf32> -> vector<8x48xf32>
    %228 = vector.broadcast %15 : vector<1x48xf32> to vector<8x48xf32>
    %229 = arith.addf %227, %228 : vector<8x48xf32>
    %cst_96 = arith.constant 0.000000e+00 : f32
    %230 = vector.broadcast %cst_96 : f32 to vector<8x64xf32>
    %231 = tpu.concatenate %218, %229, %230 in 1 : vector<8x16xf32>, vector<8x48xf32>, vector<8x64xf32> -> vector<8x128xf32>
    %c0_97 = arith.constant 0 : index
    %c0_98 = arith.constant 0 : index
    %232 = vector.load %arg5[%c0_97, %c0_98] : memref<8x128xf32, #tpu.memory_space<vmem>>, vector<8x128xf32>
    tpu.vector_store %arg5[%c0_97, %c0_98], %231 {strides = array<i32>} : memref<8x128xf32, #tpu.memory_space<vmem>>, vector<8x128xf32>,
    return
  }
}

</mosaic_0001>

<llo_original>
// kernel: encoder_addition_forward.1
$region0: #{encoder_addition_forward.1}
  #allocation0 [shape = 'u32[]', space=smem, size = 0x4, offset = 0x4, fixed_abs, tag = 'smem constant byte address 0x4 - core index']
  #allocation1 [shape = 'u32[144,128]{1,0:T(1,128)}', space=vmem, size = 0x12000, scoped, tag = 'internal scratch']
  %s0 = inlined_call_operand.hbm [shape: f32[8,352], index: 0, kind: input, shape index: {}]
  %s1 = inlined_call_operand.hbm [shape: f32[8,64], index: 1, kind: input, shape index: {}]
  %s2 = inlined_call_operand.hbm [shape: f32[32,128], index: 2, kind: input, shape index: {}]
  %s3 = inlined_call_operand.hbm [shape: f32[32,128], index: 3, kind: input, shape index: {}]
  %s4 = inlined_call_operand.vmem [shape: f32[8,128], index: 4, kind: input, shape index: {}]
  %s5 = inlined_call_operand.vmem [shape: f32[8,128], index: 5, kind: output, shape index: {}]
  %s6 = sld [smem:[#allocation0]]
  $region46: #{encoder_addition_forward.1} parent=0
    _
  %s8 = ssub.s32 1, %s6
  %s9 = scalar_select 0, %s8, %s6
  $region1: #{encoder_addition_forward.1} parent=0
    #allocation2 [shape = 'u8[12288]{0}', space=vmem, size = 0x3000, scoped, tag = 'input window, operand 0, single buffered']
    #allocation3 [shape = 's32[1]{0}', space=sflag, size = 0x4, scoped, tag = 'scoped memory for encoder_addition_forward.1']
    #allocation4 [shape = 'u8[4096]{0}', space=vmem, size = 0x1000, scoped, tag = 'input window, operand 1, single buffered']
    #allocation5 [shape = 's32[1]{0}', space=sflag, size = 0x4, scoped, tag = 'scoped memory for encoder_addition_forward.1']
    #allocation6 [shape = 'u8[16384]{0}', space=vmem, size = 0x4000, scoped, tag = 'input window, operand 2, single buffered']
    #allocation7 [shape = 'u8[16384]{0}', space=vmem, size = 0x4000, scoped, tag = 'input window, operand 3, single buffered']
    #allocation8 [shape = 's32[1]{0}', space=sflag, size = 0x4, scoped, tag = 'scoped memory for encoder_addition_forward.1']
    %10 = vsyncpa [#allocation3], 0
    %11 = vsyncpa [#allocation5], 0
    %12 = vsyncpa [#allocation8], 0
    // Predicated region
    $region2: #{encoder_addition_forward.1} parent=1 // pred_check
      _
    $region3: #{encoder_addition_forward.1} parent=1 // pred_check_branch
      %14 = sbr.rel (0) target = $region5
    $region4: #{encoder_addition_forward.1} parent=1 // pred_region
      %s16 = ssub.s32 384, 384
      %17 = vsyncadd [#allocation3], %s16
      %s19 = sshll.u32 [#allocation2], 4
      %s20 = int_to_ptr.vmem [resolvable:$true] %s19
      %22 = dma.hbm_to_vmem [thread:$0]  %s0, 384, %s20, [#allocation3]
    $region5: #{encoder_addition_forward.1} parent=1 // pred_fallthru
      _
    // Predicated region
    $region6: #{encoder_addition_forward.1} parent=1 // pred_check
      _
    $region7: #{encoder_addition_forward.1} parent=1 // pred_check_branch
      %24 = sbr.rel (0) target = $region9
    $region8: #{encoder_addition_forward.1} parent=1 // pred_region
      %s26 = ssub.s32 128, 128
      %27 = vsyncadd [#allocation5], %s26
      %s29 = sshll.u32 [#allocation4], 4
      %s30 = int_to_ptr.vmem [resolvable:$true] %s29
      %32 = dma.hbm_to_vmem [thread:$0]  %s1, 128, %s30, [#allocation5]
    $region9: #{encoder_addition_forward.1} parent=1 // pred_fallthru
      _
    // Predicated region
    $region10: #{encoder_addition_forward.1} parent=1 // pred_check
      _
    $region11: #{encoder_addition_forward.1} parent=1 // pred_check_branch
      %34 = sbr.rel (0) target = $region13
    $region12: #{encoder_addition_forward.1} parent=1 // pred_region
      %s36 = ssub.s32 512, 512
      %37 = vsyncadd [#allocation5], %s36
      %s38 = sshll.u32 [#allocation6], 4
      %s39 = int_to_ptr.vmem [resolvable:$true] %s38
      %44 = dma.hbm_to_vmem [thread:$0]  %s2, 512, %s39, [#allocation5], 128, 128, 8
    $region13: #{encoder_addition_forward.1} parent=1 // pred_fallthru
      _
    // Predicated region
    $region14: #{encoder_addition_forward.1} parent=1 // pred_check
      _
    $region15: #{encoder_addition_forward.1} parent=1 // pred_check_branch
      %46 = sbr.rel (0) target = $region17
    $region16: #{encoder_addition_forward.1} parent=1 // pred_region
      %s48 = ssub.s32 512, 512
      %49 = vsyncadd [#allocation8], %s48
      %s50 = sshll.u32 [#allocation7], 4
      %s51 = int_to_ptr.vmem [resolvable:$true] %s50
      %56 = dma.hbm_to_vmem [thread:$0]  %s3, 512, %s51, [#allocation8], 128, 128, 8
    $region17: #{encoder_addition_forward.1} parent=1 // pred_fallthru
      _
    // Predicated region
    $region18: #{encoder_addition_forward.1} parent=1 // pred_check
      _
    $region19: #{encoder_addition_forward.1} parent=1 // pred_check_branch
      %58 = sbr.rel (0) target = $region21
    $region20: #{encoder_addition_forward.1} parent=1 // pred_region
      _
    $region21: #{encoder_addition_forward.1} parent=1 // pred_fallthru
      _
    // Predicated region
    $region22: #{encoder_addition_forward.1} parent=1 // pred_check
      _
    $region23: #{encoder_addition_forward.1} parent=1 // pred_check_branch
      %60 = sbr.rel (0) target = $region25
    $region24: #{encoder_addition_forward.1} parent=1 // pred_region
      %61 = dma.done [#allocation3], 384
    $region25: #{encoder_addition_forward.1} parent=1 // pred_fallthru
      _
    // Predicated region
    $region26: #{encoder_addition_forward.1} parent=1 // pred_check
      _
    $region27: #{encoder_addition_forward.1} parent=1 // pred_check_branch
      %63 = sbr.rel (0) target = $region29
    $region28: #{encoder_addition_forward.1} parent=1 // pred_region
      %64 = dma.done [#allocation5], 128
    $region29: #{encoder_addition_forward.1} parent=1 // pred_fallthru
      _
    // Predicated region
    $region30: #{encoder_addition_forward.1} parent=1 // pred_check
      _
    $region31: #{encoder_addition_forward.1} parent=1 // pred_check_branch
      %66 = sbr.rel (0) target = $region33
    $region32: #{encoder_addition_forward.1} parent=1 // pred_region
      %67 = dma.done [#allocation5], 512
    $region33: #{encoder_addition_forward.1} parent=1 // pred_fallthru
      _
    // Predicated region
    $region34: #{encoder_addition_forward.1} parent=1 // pred_check
      _
    $region35: #{encoder_addition_forward.1} parent=1 // pred_check_branch
      %69 = sbr.rel (0) target = $region37
    $region36: #{encoder_addition_forward.1} parent=1 // pred_region
      %70 = dma.done [#allocation8], 512
    $region37: #{encoder_addition_forward.1} parent=1 // pred_fallthru
      _
    %v71 = vld [vmem:[#allocation6] sm:$0xff]
    %v72 = vld [vmem:[#allocation6 + $0x8] sm:$0xff]
    %v73 = vld [vmem:[#allocation6 + $0x10] sm:$0xff]
    %v74 = vld [vmem:[#allocation6 + $0x18] sm:$0xff]
    %v75 = vld [vmem:[#allocation7] sm:$0xff]
    %v76 = vld [vmem:[#allocation7 + $0x8] sm:$0xff]
    %v77 = vld [vmem:[#allocation7 + $0x10] sm:$0xff]
    %v78 = vld [vmem:[#allocation7 + $0x18] sm:$0xff]
    %v79 = vld [vmem:[#allocation7] sm:$0xff]
    %v80 = vld [vmem:[#allocation7 + $0x8] sm:$0xff]
    %v81 = vld [vmem:[%s4] sm:$0x1]
    %v82 = vld [vmem:[%s4 + $0x1] sm:$0x1]
    %v83 = vld [vmem:[%s4 + $0x2] sm:$0x1]
    %v84 = vld [vmem:[%s4 + $0x3] sm:$0x1]
    %v85 = vld [vmem:[%s4 + $0x4] sm:$0x1]
    %v86 = vld [vmem:[%s4 + $0x5] sm:$0x1]
    %v87 = vld [vmem:[%s4 + $0x6] sm:$0x1]
    %v88 = vld [vmem:[%s4 + $0x7] sm:$0x1]
    %v89 = vld [vmem:[#allocation2] sm:$0xff]
    %91 = vrot.lane.b32.xlu0 %v89, 96
    %v92 = vpop.permute.xlu0 %91
    %v94 = vadd.f32 %v89, %v92
    %95 = vrot.lane.b32.xlu0 %v89, 64
    %v96 = vpop.permute.xlu0 %95
    %v98 = vadd.f32 %v94, %v96
    %99 = vrot.lane.b32.xlu0 %v89, 32
    %v100 = vpop.permute.xlu0 %99
    %v102 = vadd.f32 %v98, %v100
    %v103 = vld [vmem:[#allocation2 + $0x8] sm:$0xff]
    %v104 = vadd.f32 %v102, %v103
    %106 = vrot.lane.b32.xlu0 %v103, 96
    %v107 = vpop.permute.xlu0 %106
    %v109 = vadd.f32 %v104, %v107
    %110 = vrot.lane.b32.xlu0 %v103, 64
    %v111 = vpop.permute.xlu0 %110
    %v113 = vadd.f32 %v109, %v111
    %114 = vrot.lane.b32.xlu0 %v103, 32
    %v115 = vpop.permute.xlu0 %114
    %v117 = vadd.f32 %v113, %v115
    %v118 = vld [vmem:[#allocation2 + $0x10] sm:$0xff]
    %v119 = vadd.f32 %v117, %v118
    %121 = vrot.lane.b32.xlu0 %v118, 96
    %v122 = vpop.permute.xlu0 %121
    %v124 = vadd.f32 %v119, %v122
    %125 = vrot.lane.b32.xlu0 %v118, 64
    %v126 = vpop.permute.xlu0 %125
    %v128 = vadd.f32 %v124, %v126
    %v129 = vld [vmem:[#allocation4] sm:$0xff]
    %131 = vrot.lane.b32.xlu0 %v129, 112
    %v132 = vpop.permute.xlu0 %131
    %v134 = vadd.f32 %v129, %v132
    %135 = vrot.lane.b32.xlu0 %v129, 96
    %v136 = vpop.permute.xlu0 %135
    %v138 = vadd.f32 %v134, %v136
    %139 = vrot.lane.b32.xlu0 %v129, 80
    %v140 = vpop.permute.xlu0 %139
    %v142 = vadd.f32 %v138, %v140
    %145 = vrot.lane.b32.xlu0 %v79, 96
    %v146 = vpop.permute.xlu0 %145
    %147 = vrot.lane.b32.xlu0 %v80, 96
    %v148 = vpop.permute.xlu0 %147
    %vm151 = vcmask 130048
    %v153 = vsel %vm151, %v142, 0
    %155 = vmatprep.subr.mxu0 0.0
    %156 = vmatpush1.msra.mxu0 %v146
    %157 = vmatprep.subr.mxu0 0.0
    %158 = vmatpush1.msra.mxu0 %v148
    %159 = vmatprep.subr.mxu0 0.0
    %160 = vmatpush1.msra.mxu0 0.0
    %161 = vmatprep.subr.mxu0 0.0
    %162 = vmatpush1.msra.mxu0 0.0
    %163 = vmatprep.subr.mxu0 0.0
    %164 = vmatpush1.msra.mxu0 0.0
    %165 = vmatprep.subr.mxu0 0.0
    %166 = vmatpush1.msra.mxu0 0.0
    %167 = vmatprep.subr.mxu0 0.0
    %168 = vmatpush1.msra.mxu0 0.0
    %169 = vmatprep.subr.mxu0 0.0
    %170 = vmatpush1.msra.mxu0 0.0
    %171 = vmatprep.subr.mxu0 0.0
    %172 = vmatpush1.msra.mxu0 0.0
    %173 = vmatprep.subr.mxu0 0.0
    %174 = vmatpush1.msra.mxu0 0.0
    %175 = vmatprep.subr.mxu0 0.0
    %176 = vmatpush1.msra.mxu0 0.0
    %177 = vmatprep.subr.mxu0 0.0
    %178 = vmatpush1.msra.mxu0 0.0
    %179 = vmatprep.subr.mxu0 0.0
    %180 = vmatpush1.msra.mxu0 0.0
    %181 = vmatprep.subr.mxu0 0.0
    %182 = vmatpush1.msra.mxu0 0.0
    %183 = vmatprep.subr.mxu0 0.0
    %184 = vmatpush1.msra.mxu0 0.0
    %185 = vmatprep.subr.mxu0 0.0
    %186 = vmatpush1.msra.mxu0 0.0
    %187 = vmatprep.subr.mxu0 0.0
    %188 = vmatpush1.msra.mxu0 0.0
    %189 = vmatprep.subr.mxu0 0.0
    %190 = vmatpush1.msra.mxu0 0.0
    %191 = vmatprep.subr.mxu0 0.0
    %192 = vmatpush1.msra.mxu0 0.0
    %193 = vmatprep.subr.mxu0 0.0
    %194 = vmatpush1.msra.mxu0 0.0
    %195 = vmatprep.subr.mxu0 0.0
    %196 = vmatpush1.msra.mxu0 0.0
    %197 = vmatprep.subr.mxu0 0.0
    %198 = vmatpush1.msra.mxu0 0.0
    %199 = vmatprep.subr.mxu0 0.0
    %200 = vmatpush1.msra.mxu0 0.0
    %201 = vmatprep.subr.mxu0 0.0
    %202 = vmatpush1.msra.mxu0 0.0
    %203 = vmatprep.subr.mxu0 0.0
    %204 = vmatpush1.msra.mxu0 0.0
    %205 = vmatprep.subr.mxu0 0.0
    %206 = vmatpush1.msra.mxu0 0.0
    %207 = vmatprep.subr.mxu0 0.0
    %208 = vmatpush1.msra.mxu0 0.0
    %209 = vmatprep.subr.mxu0 0.0
    %210 = vmatpush1.msra.mxu0 0.0
    %211 = vmatprep.subr.mxu0 0.0
    %212 = vmatpush1.msra.mxu0 0.0
    %213 = vmatprep.subr.mxu0 0.0
    %214 = vmatpush1.msra.mxu0 0.0
    %215 = vmatprep.subr.mxu0 0.0
    %216 = vmatpush1.msra.mxu0 0.0
    %217 = vmatprep.subr.mxu0 0.0
    %218 = vmatpush1.msra.mxu0 0.0
    %219 = vmatprep.mubr.f32.mxu0 0.0
    %220 = vmatmul.mubr.f32.gmra.mrb[0].mxu0 %v153
    %v221 = vpop.f32.mrb[0].mxu0
    %v222 = vadd.f32 0.0, %v221
    %v223 = vpop.f32.mrb[0].mxu0
    %224 = vdwg.mxu0
    %vm225 = vcmask 261120
    %v227 = vsel %vm225, %v128, 0
    %229 = vmatprep.subr.mxu0 0.0
    %230 = vmatpush1.msra.mxu0 %v75
    %231 = vmatprep.subr.mxu0 0.0
    %232 = vmatpush1.msra.mxu0 %v76
    %233 = vmatprep.subr.mxu0 0.0
    %234 = vmatpush1.msra.mxu0 %v77
    %235 = vmatprep.subr.mxu0 0.0
    %236 = vmatpush1.msra.mxu0 %v78
    %237 = vmatprep.subr.mxu0 0.0
    %238 = vmatpush1.msra.mxu0 0.0
    %239 = vmatprep.subr.mxu0 0.0
    %240 = vmatpush1.msra.mxu0 0.0
    %241 = vmatprep.subr.mxu0 0.0
    %242 = vmatpush1.msra.mxu0 0.0
    %243 = vmatprep.subr.mxu0 0.0
    %244 = vmatpush1.msra.mxu0 0.0
    %245 = vmatprep.subr.mxu0 0.0
    %246 = vmatpush1.msra.mxu0 0.0
    %247 = vmatprep.subr.mxu0 0.0
    %248 = vmatpush1.msra.mxu0 0.0
    %249 = vmatprep.subr.mxu0 0.0
    %250 = vmatpush1.msra.mxu0 0.0
    %251 = vmatprep.subr.mxu0 0.0
    %252 = vmatpush1.msra.mxu0 0.0
    %253 = vmatprep.subr.mxu0 0.0
    %254 = vmatpush1.msra.mxu0 0.0
    %255 = vmatprep.subr.mxu0 0.0
    %256 = vmatpush1.msra.mxu0 0.0
    %257 = vmatprep.subr.mxu0 0.0
    %258 = vmatpush1.msra.mxu0 0.0
    %259 = vmatprep.subr.mxu0 0.0
    %260 = vmatpush1.msra.mxu0 0.0
    %261 = vmatprep.subr.mxu0 0.0
    %262 = vmatpush1.msra.mxu0 0.0
    %263 = vmatprep.subr.mxu0 0.0
    %264 = vmatpush1.msra.mxu0 0.0
    %265 = vmatprep.subr.mxu0 0.0
    %266 = vmatpush1.msra.mxu0 0.0
    %267 = vmatprep.subr.mxu0 0.0
    %268 = vmatpush1.msra.mxu0 0.0
    %269 = vmatprep.subr.mxu0 0.0
    %270 = vmatpush1.msra.mxu0 0.0
    %271 = vmatprep.subr.mxu0 0.0
    %272 = vmatpush1.msra.mxu0 0.0
    %273 = vmatprep.subr.mxu0 0.0
    %274 = vmatpush1.msra.mxu0 0.0
    %275 = vmatprep.subr.mxu0 0.0
    %276 = vmatpush1.msra.mxu0 0.0
    %277 = vmatprep.subr.mxu0 0.0
    %278 = vmatpush1.msra.mxu0 0.0
    %279 = vmatprep.subr.mxu0 0.0
    %280 = vmatpush1.msra.mxu0 0.0
    %281 = vmatprep.subr.mxu0 0.0
    %282 = vmatpush1.msra.mxu0 0.0
    %283 = vmatprep.subr.mxu0 0.0
    %284 = vmatpush1.msra.mxu0 0.0
    %285 = vmatprep.subr.mxu0 0.0
    %286 = vmatpush1.msra.mxu0 0.0
    %287 = vmatprep.subr.mxu0 0.0
    %288 = vmatpush1.msra.mxu0 0.0
    %289 = vmatprep.subr.mxu0 0.0
    %290 = vmatpush1.msra.mxu0 0.0
    %291 = vmatprep.subr.mxu0 0.0
    %292 = vmatpush1.msra.mxu0 0.0
    %293 = vmatprep.mubr.f32.mxu0 0.0
    %294 = vmatmul.mubr.f32.gmra.mrb[0].mxu0 %v227
    %v295 = vpop.f32.mrb[0].mxu0
    %v296 = vadd.f32 %v222, %v295
    %v297 = vpop.f32.mrb[0].mxu0
    %298 = vdwg.mxu0
    %v299 = vlaneseq
    %v300 = vshrl.u32 %v299, 7
    %v301 = vsub.s32 0, %v300
    %v302 = vrot.slane %v81, %v301
    %v303 = vadd.f32 %v296, %v302
    %vm304 = vcmp.ge.f32.partialorder %v303, 0.0
    %v305 = vmul.f32 %v303, 0.01
    %v306 = vsel %vm304, %v303, %v305
    %v308 = vsel %vm225, %v306, 0
    %310 = vmatprep.subr.mxu0 0.0
    %311 = vmatpush1.msra.mxu0 %v71
    %312 = vmatprep.subr.mxu0 0.0
    %313 = vmatpush1.msra.mxu0 %v72
    %314 = vmatprep.subr.mxu0 0.0
    %315 = vmatpush1.msra.mxu0 %v73
    %316 = vmatprep.subr.mxu0 0.0
    %317 = vmatpush1.msra.mxu0 %v74
    %318 = vmatprep.subr.mxu0 0.0
    %319 = vmatpush1.msra.mxu0 0.0
    %320 = vmatprep.subr.mxu0 0.0
    %321 = vmatpush1.msra.mxu0 0.0
    %322 = vmatprep.subr.mxu0 0.0
    %323 = vmatpush1.msra.mxu0 0.0
    %324 = vmatprep.subr.mxu0 0.0
    %325 = vmatpush1.msra.mxu0 0.0
    %326 = vmatprep.subr.mxu0 0.0
    %327 = vmatpush1.msra.mxu0 0.0
    %328 = vmatprep.subr.mxu0 0.0
    %329 = vmatpush1.msra.mxu0 0.0
    %330 = vmatprep.subr.mxu0 0.0
    %331 = vmatpush1.msra.mxu0 0.0
    %332 = vmatprep.subr.mxu0 0.0
    %333 = vmatpush1.msra.mxu0 0.0
    %334 = vmatprep.subr.mxu0 0.0
    %335 = vmatpush1.msra.mxu0 0.0
    %336 = vmatprep.subr.mxu0 0.0
    %337 = vmatpush1.msra.mxu0 0.0
    %338 = vmatprep.subr.mxu0 0.0
    %339 = vmatpush1.msra.mxu0 0.0
    %340 = vmatprep.subr.mxu0 0.0
    %341 = vmatpush1.msra.mxu0 0.0
    %342 = vmatprep.subr.mxu0 0.0
    %343 = vmatpush1.msra.mxu0 0.0
    %344 = vmatprep.subr.mxu0 0.0
    %345 = vmatpush1.msra.mxu0 0.0
    %346 = vmatprep.subr.mxu0 0.0
    %347 = vmatpush1.msra.mxu0 0.0
    %348 = vmatprep.subr.mxu0 0.0
    %349 = vmatpush1.msra.mxu0 0.0
    %350 = vmatprep.subr.mxu0 0.0
    %351 = vmatpush1.msra.mxu0 0.0
    %352 = vmatprep.subr.mxu0 0.0
    %353 = vmatpush1.msra.mxu0 0.0
    %354 = vmatprep.subr.mxu0 0.0
    %355 = vmatpush1.msra.mxu0 0.0
    %356 = vmatprep.subr.mxu0 0.0
    %357 = vmatpush1.msra.mxu0 0.0
    %358 = vmatprep.subr.mxu0 0.0
    %359 = vmatpush1.msra.mxu0 0.0
    %360 = vmatprep.subr.mxu0 0.0
    %361 = vmatpush1.msra.mxu0 0.0
    %362 = vmatprep.subr.mxu0 0.0
    %363 = vmatpush1.msra.mxu0 0.0
    %364 = vmatprep.subr.mxu0 0.0
    %365 = vmatpush1.msra.mxu0 0.0
    %366 = vmatprep.subr.mxu0 0.0
    %367 = vmatpush1.msra.mxu0 0.0
    %368 = vmatprep.subr.mxu0 0.0
    %369 = vmatpush1.msra.mxu0 0.0
    %370 = vmatprep.subr.mxu0 0.0
    %371 = vmatpush1.msra.mxu0 0.0
    %372 = vmatprep.subr.mxu0 0.0
    %373 = vmatpush1.msra.mxu0 0.0
    %374 = vmatprep.mubr.f32.mxu0 0.0
    %375 = vmatmul.mubr.f32.gmra.mrb[0].mxu0 %v308
    %v376 = vpop.f32.mrb[0].mxu0
    %v377 = vadd.f32 0.0, %v376
    %v378 = vpop.f32.mrb[0].mxu0
    %379 = vdwg.mxu0
    %381 = vrot.lane.b32.xlu0 %v377, 96
    %v382 = vpop.permute.xlu0 %381
    %vm383 = vcmask 64512
    %v384 = vsel %vm383, %v377, 0
    %v386 = vsel %vm383, %v382, 0
    %388 = vmatprep.subr.mxu0 0.0
    %389 = vmatpush1.xpose.msra.mxu0 %v386
    %390 = vmatprep.subr.mxu0 0.0
    %391 = vmatpush1.xpose.msra.mxu0 0.0
    %392 = vmatprep.subr.mxu0 0.0
    %393 = vmatpush1.xpose.msra.mxu0 0.0
    %394 = vmatprep.subr.mxu0 0.0
    %395 = vmatpush1.xpose.msra.mxu0 0.0
    %396 = vmatprep.subr.mxu0 0.0
    %397 = vmatpush1.xpose.msra.mxu0 0.0
    %398 = vmatprep.subr.mxu0 0.0
    %399 = vmatpush1.xpose.msra.mxu0 0.0
    %400 = vmatprep.subr.mxu0 0.0
    %401 = vmatpush1.xpose.msra.mxu0 0.0
    %402 = vmatprep.subr.mxu0 0.0
    %403 = vmatpush1.xpose.msra.mxu0 0.0
    %404 = vmatprep.subr.mxu0 0.0
    %405 = vmatpush1.xpose.msra.mxu0 0.0
    %406 = vmatprep.subr.mxu0 0.0
    %407 = vmatpush1.xpose.msra.mxu0 0.0
    %408 = vmatprep.subr.mxu0 0.0
    %409 = vmatpush1.xpose.msra.mxu0 0.0
    %410 = vmatprep.subr.mxu0 0.0
    %411 = vmatpush1.xpose.msra.mxu0 0.0
    %412 = vmatprep.subr.mxu0 0.0
    %413 = vmatpush1.xpose.msra.mxu0 0.0
    %414 = vmatprep.subr.mxu0 0.0
    %415 = vmatpush1.xpose.msra.mxu0 0.0
    %416 = vmatprep.subr.mxu0 0.0
    %417 = vmatpush1.xpose.msra.mxu0 0.0
    %418 = vmatprep.subr.mxu0 0.0
    %419 = vmatpush1.xpose.msra.mxu0 0.0
    %420 = vmatprep.subr.mxu0 0.0
    %421 = vmatpush1.xpose.msra.mxu0 0.0
    %422 = vmatprep.subr.mxu0 0.0
    %423 = vmatpush1.xpose.msra.mxu0 0.0
    %424 = vmatprep.subr.mxu0 0.0
    %425 = vmatpush1.xpose.msra.mxu0 0.0
    %426 = vmatprep.subr.mxu0 0.0
    %427 = vmatpush1.xpose.msra.mxu0 0.0
    %428 = vmatprep.subr.mxu0 0.0
    %429 = vmatpush1.xpose.msra.mxu0 0.0
    %430 = vmatprep.subr.mxu0 0.0
    %431 = vmatpush1.xpose.msra.mxu0 0.0
    %432 = vmatprep.subr.mxu0 0.0
    %433 = vmatpush1.xpose.msra.mxu0 0.0
    %434 = vmatprep.subr.mxu0 0.0
    %435 = vmatpush1.xpose.msra.mxu0 0.0
    %436 = vmatprep.subr.mxu0 0.0
    %437 = vmatpush1.xpose.msra.mxu0 0.0
    %438 = vmatprep.subr.mxu0 0.0
    %439 = vmatpush1.xpose.msra.mxu0 0.0
    %440 = vmatprep.subr.mxu0 0.0
    %441 = vmatpush1.xpose.msra.mxu0 0.0
    %442 = vmatprep.subr.mxu0 0.0
    %443 = vmatpush1.xpose.msra.mxu0 0.0
    %444 = vmatprep.subr.mxu0 0.0
    %445 = vmatpush1.xpose.msra.mxu0 0.0
    %446 = vmatprep.subr.mxu0 0.0
    %447 = vmatpush1.xpose.msra.mxu0 0.0
    %448 = vmatprep.subr.mxu0 0.0
    %449 = vmatpush1.xpose.msra.mxu0 0.0
    %450 = vmatprep.subr.mxu0 0.0
    %451 = vmatpush1.xpose.msra.mxu0 0.0
    %452 = vmatprep.mubr.f32.mxu0 0.0
    %453 = vmatmul.mubr.f32.gmra.mrb[0].mxu0 %v384
    %v454 = vpop.f32.mrb[0].mxu0
    %v455 = vadd.f32 0.0, %v454
    %v456 = vpop.f32.mrb[0].mxu0
    %457 = vdwg.mxu0
    %v458 = vmul.f32 %v455, 0.35355338
    %v459 = vsel %vm383, %v458, -inf
    %460 = vmax.xlane.f32.xlu0 %v459
    %v461 = vpop.xlane.xlu0 %460
    %v462 = vsub.f32 %v458, %v461
    %v463 = vmul.f32 %v462, 1.442695
    %v464 = vpow.pop %v463
    %v465 = vsel %vm383, %v464, 0.0
    %466 = vadd.xlane.f32.xlu0 %v465
    %v467 = vpop.xlane.xlu0 %466
    %v468 = vrcp.pop %v467
    %v469 = vmul.f32 %v464, %v468
    %470 = vrot.lane.b32.xlu0 %v377, 64
    %v471 = vpop.permute.xlu0 %470
    %v474 = vsel %vm383, %v469, 0
    %476 = vmatprep.subr.mxu0 0.0
    %477 = vmatpush1.msra.mxu0 %v471
    %478 = vmatprep.subr.mxu0 0.0
    %479 = vmatpush1.msra.mxu0 0.0
    %480 = vmatprep.subr.mxu0 0.0
    %481 = vmatpush1.msra.mxu0 0.0
    %482 = vmatprep.subr.mxu0 0.0
    %483 = vmatpush1.msra.mxu0 0.0
    %484 = vmatprep.subr.mxu0 0.0
    %485 = vmatpush1.msra.mxu0 0.0
    %486 = vmatprep.subr.mxu0 0.0
    %487 = vmatpush1.msra.mxu0 0.0
    %488 = vmatprep.subr.mxu0 0.0
    %489 = vmatpush1.msra.mxu0 0.0
    %490 = vmatprep.subr.mxu0 0.0
    %491 = vmatpush1.msra.mxu0 0.0
    %492 = vmatprep.subr.mxu0 0.0
    %493 = vmatpush1.msra.mxu0 0.0
    %494 = vmatprep.subr.mxu0 0.0
    %495 = vmatpush1.msra.mxu0 0.0
    %496 = vmatprep.subr.mxu0 0.0
    %497 = vmatpush1.msra.mxu0 0.0
    %498 = vmatprep.subr.mxu0 0.0
    %499 = vmatpush1.msra.mxu0 0.0
    %500 = vmatprep.subr.mxu0 0.0
    %501 = vmatpush1.msra.mxu0 0.0
    %502 = vmatprep.subr.mxu0 0.0
    %503 = vmatpush1.msra.mxu0 0.0
    %504 = vmatprep.subr.mxu0 0.0
    %505 = vmatpush1.msra.mxu0 0.0
    %506 = vmatprep.subr.mxu0 0.0
    %507 = vmatpush1.msra.mxu0 0.0
    %508 = vmatprep.subr.mxu0 0.0
    %509 = vmatpush1.msra.mxu0 0.0
    %510 = vmatprep.subr.mxu0 0.0
    %511 = vmatpush1.msra.mxu0 0.0
    %512 = vmatprep.subr.mxu0 0.0
    %513 = vmatpush1.msra.mxu0 0.0
    %514 = vmatprep.subr.mxu0 0.0
    %515 = vmatpush1.msra.mxu0 0.0
    %516 = vmatprep.subr.mxu0 0.0
    %517 = vmatpush1.msra.mxu0 0.0
    %518 = vmatprep.subr.mxu0 0.0
    %519 = vmatpush1.msra.mxu0 0.0
    %520 = vmatprep.subr.mxu0 0.0
    %521 = vmatpush1.msra.mxu0 0.0
    %522 = vmatprep.subr.mxu0 0.0
    %523 = vmatpush1.msra.mxu0 0.0
    %524 = vmatprep.subr.mxu0 0.0
    %525 = vmatpush1.msra.mxu0 0.0
    %526 = vmatprep.subr.mxu0 0.0
    %527 = vmatpush1.msra.mxu0 0.0
    %528 = vmatprep.subr.mxu0 0.0
    %529 = vmatpush1.msra.mxu0 0.0
    %530 = vmatprep.subr.mxu0 0.0
    %531 = vmatpush1.msra.mxu0 0.0
    %532 = vmatprep.subr.mxu0 0.0
    %533 = vmatpush1.msra.mxu0 0.0
    %534 = vmatprep.subr.mxu0 0.0
    %535 = vmatpush1.msra.mxu0 0.0
    %536 = vmatprep.subr.mxu0 0.0
    %537 = vmatpush1.msra.mxu0 0.0
    %538 = vmatprep.subr.mxu0 0.0
    %539 = vmatpush1.msra.mxu0 0.0
    %540 = vmatprep.mubr.f32.mxu0 0.0
    %541 = vmatmul.mubr.f32.gmra.mrb[0].mxu0 %v474
    %v542 = vpop.f32.mrb[0].mxu0
    %v543 = vadd.f32 0.0, %v542
    %v544 = vpop.f32.mrb[0].mxu0
    %545 = vdwg.mxu0
    %546 = vxpose.xlu0.b32.start [1/16] %v543, 128
    %547 = vxpose.xlu0.b32.cont [2/16] 0.0, 128
    %548 = vxpose.xlu0.b32.cont [3/16] 0.0, 128
    %549 = vxpose.xlu0.b32.cont [4/16] 0.0, 128
    %550 = vxpose.xlu0.b32.cont [5/16] 0.0, 128
    %551 = vxpose.xlu0.b32.cont [6/16] 0.0, 128
    %552 = vxpose.xlu0.b32.cont [7/16] 0.0, 128
    %553 = vxpose.xlu0.b32.cont [8/16] 0.0, 128
    %554 = vxpose.xlu0.b32.cont [9/16] 0.0, 128
    %555 = vxpose.xlu0.b32.cont [10/16] 0.0, 128
    %556 = vxpose.xlu0.b32.cont [11/16] 0.0, 128
    %557 = vxpose.xlu0.b32.cont [12/16] 0.0, 128
    %558 = vxpose.xlu0.b32.cont [13/16] 0.0, 128
    %559 = vxpose.xlu0.b32.cont [14/16] 0.0, 128
    %560 = vxpose.xlu0.b32.cont [15/16] 0.0, 128
    %561 = vxpose.xlu0.b32.end [16/16] 0.0, 128
    %v562 = vpop.trf.xlu0
    %v563 = vpop.trf.xlu0
    %v564 = vpop.trf.xlu0
    %v565 = vpop.trf.xlu0
    %v566 = vpop.trf.xlu0
    %v567 = vpop.trf.xlu0
    %v568 = vpop.trf.xlu0
    %v569 = vpop.trf.xlu0
    %v570 = vpop.trf.xlu0
    %v571 = vpop.trf.xlu0
    %v572 = vpop.trf.xlu0
    %v573 = vpop.trf.xlu0
    %v574 = vpop.trf.xlu0
    %v575 = vpop.trf.xlu0
    %v576 = vpop.trf.xlu0
    %v577 = vpop.trf.xlu0
    %578 = vrot.lane.b32.xlu0 %v377, 120
    %v579 = vpop.permute.xlu0 %578
    %580 = vrot.lane.b32.xlu0 %v377, 88
    %v581 = vpop.permute.xlu0 %580
    %v582 = vsel %vm383, %v579, 0
    %v584 = vsel %vm383, %v581, 0
    %586 = vmatprep.subr.mxu0 0.0
    %587 = vmatpush1.xpose.msra.mxu0 %v584
    %588 = vmatprep.subr.mxu0 0.0
    %589 = vmatpush1.xpose.msra.mxu0 0.0
    %590 = vmatprep.subr.mxu0 0.0
    %591 = vmatpush1.xpose.msra.mxu0 0.0
    %592 = vmatprep.subr.mxu0 0.0
    %593 = vmatpush1.xpose.msra.mxu0 0.0
    %594 = vmatprep.subr.mxu0 0.0
    %595 = vmatpush1.xpose.msra.mxu0 0.0
    %596 = vmatprep.subr.mxu0 0.0
    %597 = vmatpush1.xpose.msra.mxu0 0.0
    %598 = vmatprep.subr.mxu0 0.0
    %599 = vmatpush1.xpose.msra.mxu0 0.0
    %600 = vmatprep.subr.mxu0 0.0
    %601 = vmatpush1.xpose.msra.mxu0 0.0
    %602 = vmatprep.subr.mxu0 0.0
    %603 = vmatpush1.xpose.msra.mxu0 0.0
    %604 = vmatprep.subr.mxu0 0.0
    %605 = vmatpush1.xpose.msra.mxu0 0.0
    %606 = vmatprep.subr.mxu0 0.0
    %607 = vmatpush1.xpose.msra.mxu0 0.0
    %608 = vmatprep.subr.mxu0 0.0
    %609 = vmatpush1.xpose.msra.mxu0 0.0
    %610 = vmatprep.subr.mxu0 0.0
    %611 = vmatpush1.xpose.msra.mxu0 0.0
    %612 = vmatprep.subr.mxu0 0.0
    %613 = vmatpush1.xpose.msra.mxu0 0.0
    %614 = vmatprep.subr.mxu0 0.0
    %615 = vmatpush1.xpose.msra.mxu0 0.0
    %616 = vmatprep.subr.mxu0 0.0
    %617 = vmatpush1.xpose.msra.mxu0 0.0
    %618 = vmatprep.subr.mxu0 0.0
    %619 = vmatpush1.xpose.msra.mxu0 0.0
    %620 = vmatprep.subr.mxu0 0.0
    %621 = vmatpush1.xpose.msra.mxu0 0.0
    %622 = vmatprep.subr.mxu0 0.0
    %623 = vmatpush1.xpose.msra.mxu0 0.0
    %624 = vmatprep.subr.mxu0 0.0
    %625 = vmatpush1.xpose.msra.mxu0 0.0
    %626 = vmatprep.subr.mxu0 0.0
    %627 = vmatpush1.xpose.msra.mxu0 0.0
    %628 = vmatprep.subr.mxu0 0.0
    %629 = vmatpush1.xpose.msra.mxu0 0.0
    %630 = vmatprep.subr.mxu0 0.0
    %631 = vmatpush1.xpose.msra.mxu0 0.0
    %632 = vmatprep.subr.mxu0 0.0
    %633 = vmatpush1.xpose.msra.mxu0 0.0
    %634 = vmatprep.subr.mxu0 0.0
    %635 = vmatpush1.xpose.msra.mxu0 0.0
    %636 = vmatprep.subr.mxu0 0.0
    %637 = vmatpush1.xpose.msra.mxu0 0.0
    %638 = vmatprep.subr.mxu0 0.0
    %639 = vmatpush1.xpose.msra.mxu0 0.0
    %640 = vmatprep.subr.mxu0 0.0
    %641 = vmatpush1.xpose.msra.mxu0 0.0
    %642 = vmatprep.subr.mxu0 0.0
    %643 = vmatpush1.xpose.msra.mxu0 0.0
    %644 = vmatprep.subr.mxu0 0.0
    %645 = vmatpush1.xpose.msra.mxu0 0.0
    %646 = vmatprep.subr.mxu0 0.0
    %647 = vmatpush1.xpose.msra.mxu0 0.0
    %648 = vmatprep.subr.mxu0 0.0
    %649 = vmatpush1.xpose.msra.mxu0 0.0
    %650 = vmatprep.mubr.f32.mxu0 0.0
    %651 = vmatmul.mubr.f32.gmra.mrb[0].mxu0 %v582
    %v652 = vpop.f32.mrb[0].mxu0
    %v653 = vadd.f32 0.0, %v652
    %v654 = vpop.f32.mrb[0].mxu0
    %655 = vdwg.mxu0
    %v656 = vmul.f32 %v653, 0.35355338
    %v657 = vsel %vm383, %v656, -inf
    %658 = vmax.xlane.f32.xlu0 %v657
    %v659 = vpop.xlane.xlu0 %658
    %v660 = vsub.f32 %v656, %v659
    %v661 = vmul.f32 %v660, 1.442695
    %v662 = vpow.pop %v661
    %v663 = vsel %vm383, %v662, 0.0
    %664 = vadd.xlane.f32.xlu0 %v663
    %v665 = vpop.xlane.xlu0 %664
    %v666 = vrcp.pop %v665
    %v667 = vmul.f32 %v662, %v666
    %668 = vrot.lane.b32.xlu0 %v377, 56
    %v669 = vpop.permute.xlu0 %668
    %v672 = vsel %vm383, %v667, 0
    %674 = vmatprep.subr.mxu0 0.0
    %675 = vmatpush1.msra.mxu0 %v669
    %676 = vmatprep.subr.mxu0 0.0
    %677 = vmatpush1.msra.mxu0 0.0
    %678 = vmatprep.subr.mxu0 0.0
    %679 = vmatpush1.msra.mxu0 0.0
    %680 = vmatprep.subr.mxu0 0.0
    %681 = vmatpush1.msra.mxu0 0.0
    %682 = vmatprep.subr.mxu0 0.0
    %683 = vmatpush1.msra.mxu0 0.0
    %684 = vmatprep.subr.mxu0 0.0
    %685 = vmatpush1.msra.mxu0 0.0
    %686 = vmatprep.subr.mxu0 0.0
    %687 = vmatpush1.msra.mxu0 0.0
    %688 = vmatprep.subr.mxu0 0.0
    %689 = vmatpush1.msra.mxu0 0.0
    %690 = vmatprep.subr.mxu0 0.0
    %691 = vmatpush1.msra.mxu0 0.0
    %692 = vmatprep.subr.mxu0 0.0
    %693 = vmatpush1.msra.mxu0 0.0
    %694 = vmatprep.subr.mxu0 0.0
    %695 = vmatpush1.msra.mxu0 0.0
    %696 = vmatprep.subr.mxu0 0.0
    %697 = vmatpush1.msra.mxu0 0.0
    %698 = vmatprep.subr.mxu0 0.0
    %699 = vmatpush1.msra.mxu0 0.0
    %700 = vmatprep.subr.mxu0 0.0
    %701 = vmatpush1.msra.mxu0 0.0
    %702 = vmatprep.subr.mxu0 0.0
    %703 = vmatpush1.msra.mxu0 0.0
    %704 = vmatprep.subr.mxu0 0.0
    %705 = vmatpush1.msra.mxu0 0.0
    %706 = vmatprep.subr.mxu0 0.0
    %707 = vmatpush1.msra.mxu0 0.0
    %708 = vmatprep.subr.mxu0 0.0
    %709 = vmatpush1.msra.mxu0 0.0
    %710 = vmatprep.subr.mxu0 0.0
    %711 = vmatpush1.msra.mxu0 0.0
    %712 = vmatprep.subr.mxu0 0.0
    %713 = vmatpush1.msra.mxu0 0.0
    %714 = vmatprep.subr.mxu0 0.0
    %715 = vmatpush1.msra.mxu0 0.0
    %716 = vmatprep.subr.mxu0 0.0
    %717 = vmatpush1.msra.mxu0 0.0
    %718 = vmatprep.subr.mxu0 0.0
    %719 = vmatpush1.msra.mxu0 0.0
    %720 = vmatprep.subr.mxu0 0.0
    %721 = vmatpush1.msra.mxu0 0.0
    %722 = vmatprep.subr.mxu0 0.0
    %723 = vmatpush1.msra.mxu0 0.0
    %724 = vmatprep.subr.mxu0 0.0
    %725 = vmatpush1.msra.mxu0 0.0
    %726 = vmatprep.subr.mxu0 0.0
    %727 = vmatpush1.msra.mxu0 0.0
    %728 = vmatprep.subr.mxu0 0.0
    %729 = vmatpush1.msra.mxu0 0.0
    %730 = vmatprep.subr.mxu0 0.0
    %731 = vmatpush1.msra.mxu0 0.0
    %732 = vmatprep.subr.mxu0 0.0
    %733 = vmatpush1.msra.mxu0 0.0
    %734 = vmatprep.subr.mxu0 0.0
    %735 = vmatpush1.msra.mxu0 0.0
    %736 = vmatprep.subr.mxu0 0.0
    %737 = vmatpush1.msra.mxu0 0.0
    %738 = vmatprep.mubr.f32.mxu0 0.0
    %739 = vmatmul.mubr.f32.gmra.mrb[0].mxu0 %v672
    %v740 = vpop.f32.mrb[0].mxu0
    %v741 = vadd.f32 0.0, %v740
    %v742 = vpop.f32.mrb[0].mxu0
    %743 = vdwg.mxu0
    %744 = vxpose.xlu0.b32.start [1/16] %v741, 128
    %745 = vxpose.xlu0.b32.cont [2/16] 0.0, 128
    %746 = vxpose.xlu0.b32.cont [3/16] 0.0, 128
    %747 = vxpose.xlu0.b32.cont [4/16] 0.0, 128
    %748 = vxpose.xlu0.b32.cont [5/16] 0.0, 128
    %749 = vxpose.xlu0.b32.cont [6/16] 0.0, 128
    %750 = vxpose.xlu0.b32.cont [7/16] 0.0, 128
    %751 = vxpose.xlu0.b32.cont [8/16] 0.0, 128
    %752 = vxpose.xlu0.b32.cont [9/16] 0.0, 128
    %753 = vxpose.xlu0.b32.cont [10/16] 0.0, 128
    %754 = vxpose.xlu0.b32.cont [11/16] 0.0, 128
    %755 = vxpose.xlu0.b32.cont [12/16] 0.0, 128
    %756 = vxpose.xlu0.b32.cont [13/16] 0.0, 128
    %757 = vxpose.xlu0.b32.cont [14/16] 0.0, 128
    %758 = vxpose.xlu0.b32.cont [15/16] 0.0, 128
    %759 = vxpose.xlu0.b32.end [16/16] 0.0, 128
    %v760 = vpop.trf.xlu0
    %v761 = vpop.trf.xlu0
    %v762 = vpop.trf.xlu0
    %v763 = vpop.trf.xlu0
    %v764 = vpop.trf.xlu0
    %v765 = vpop.trf.xlu0
    %v766 = vpop.trf.xlu0
    %v767 = vpop.trf.xlu0
    %v768 = vpop.trf.xlu0
    %v769 = vpop.trf.xlu0
    %v770 = vpop.trf.xlu0
    %v771 = vpop.trf.xlu0
    %v772 = vpop.trf.xlu0
    %v773 = vpop.trf.xlu0
    %v774 = vpop.trf.xlu0
    %v775 = vpop.trf.xlu0
    %776 = vrot.lane.b32.xlu0 %v377, 112
    %v777 = vpop.permute.xlu0 %776
    %778 = vrot.lane.b32.xlu0 %v377, 80
    %v779 = vpop.permute.xlu0 %778
    %v780 = vsel %vm383, %v777, 0
    %v782 = vsel %vm383, %v779, 0
    %784 = vmatprep.subr.mxu0 0.0
    %785 = vmatpush1.xpose.msra.mxu0 %v782
    %786 = vmatprep.subr.mxu0 0.0
    %787 = vmatpush1.xpose.msra.mxu0 0.0
    %788 = vmatprep.subr.mxu0 0.0
    %789 = vmatpush1.xpose.msra.mxu0 0.0
    %790 = vmatprep.subr.mxu0 0.0
    %791 = vmatpush1.xpose.msra.mxu0 0.0
    %792 = vmatprep.subr.mxu0 0.0
    %793 = vmatpush1.xpose.msra.mxu0 0.0
    %794 = vmatprep.subr.mxu0 0.0
    %795 = vmatpush1.xpose.msra.mxu0 0.0
    %796 = vmatprep.subr.mxu0 0.0
    %797 = vmatpush1.xpose.msra.mxu0 0.0
    %798 = vmatprep.subr.mxu0 0.0
    %799 = vmatpush1.xpose.msra.mxu0 0.0
    %800 = vmatprep.subr.mxu0 0.0
    %801 = vmatpush1.xpose.msra.mxu0 0.0
    %802 = vmatprep.subr.mxu0 0.0
    %803 = vmatpush1.xpose.msra.mxu0 0.0
    %804 = vmatprep.subr.mxu0 0.0
    %805 = vmatpush1.xpose.msra.mxu0 0.0
    %806 = vmatprep.subr.mxu0 0.0
    %807 = vmatpush1.xpose.msra.mxu0 0.0
    %808 = vmatprep.subr.mxu0 0.0
    %809 = vmatpush1.xpose.msra.mxu0 0.0
    %810 = vmatprep.subr.mxu0 0.0
    %811 = vmatpush1.xpose.msra.mxu0 0.0
    %812 = vmatprep.subr.mxu0 0.0
    %813 = vmatpush1.xpose.msra.mxu0 0.0
    %814 = vmatprep.subr.mxu0 0.0
    %815 = vmatpush1.xpose.msra.mxu0 0.0
    %816 = vmatprep.subr.mxu0 0.0
    %817 = vmatpush1.xpose.msra.mxu0 0.0
    %818 = vmatprep.subr.mxu0 0.0
    %819 = vmatpush1.xpose.msra.mxu0 0.0
    %820 = vmatprep.subr.mxu0 0.0
    %821 = vmatpush1.xpose.msra.mxu0 0.0
    %822 = vmatprep.subr.mxu0 0.0
    %823 = vmatpush1.xpose.msra.mxu0 0.0
    %824 = vmatprep.subr.mxu0 0.0
    %825 = vmatpush1.xpose.msra.mxu0 0.0
    %826 = vmatprep.subr.mxu0 0.0
    %827 = vmatpush1.xpose.msra.mxu0 0.0
    %828 = vmatprep.subr.mxu0 0.0
    %829 = vmatpush1.xpose.msra.mxu0 0.0
    %830 = vmatprep.subr.mxu0 0.0
    %831 = vmatpush1.xpose.msra.mxu0 0.0
    %832 = vmatprep.subr.mxu0 0.0
    %833 = vmatpush1.xpose.msra.mxu0 0.0
    %834 = vmatprep.subr.mxu0 0.0
    %835 = vmatpush1.xpose.msra.mxu0 0.0
    %836 = vmatprep.subr.mxu0 0.0
    %837 = vmatpush1.xpose.msra.mxu0 0.0
    %838 = vmatprep.subr.mxu0 0.0
    %839 = vmatpush1.xpose.msra.mxu0 0.0
    %840 = vmatprep.subr.mxu0 0.0
    %841 = vmatpush1.xpose.msra.mxu0 0.0
    %842 = vmatprep.subr.mxu0 0.0
    %843 = vmatpush1.xpose.msra.mxu0 0.0
    %844 = vmatprep.subr.mxu0 0.0
    %845 = vmatpush1.xpose.msra.mxu0 0.0
    %846 = vmatprep.subr.mxu0 0.0
    %847 = vmatpush1.xpose.msra.mxu0 0.0
    %848 = vmatprep.mubr.f32.mxu0 0.0
    %849 = vmatmul.mubr.f32.gmra.mrb[0].mxu0 %v780
    %v850 = vpop.f32.mrb[0].mxu0
    %v851 = vadd.f32 0.0, %v850
    %v852 = vpop.f32.mrb[0].mxu0
    %853 = vdwg.mxu0
    %v854 = vmul.f32 %v851, 0.35355338
    %v855 = vsel %vm383, %v854, -inf
    %856 = vmax.xlane.f32.xlu0 %v855
    %v857 = vpop.xlane.xlu0 %856
    %v858 = vsub.f32 %v854, %v857
    %v859 = vmul.f32 %v858, 1.442695
    %v860 = vpow.pop %v859
    %v861 = vsel %vm383, %v860, 0.0
    %862 = vadd.xlane.f32.xlu0 %v861
    %v863 = vpop.xlane.xlu0 %862
    %v864 = vrcp.pop %v863
    %v865 = vmul.f32 %v860, %v864
    %866 = vrot.lane.b32.xlu0 %v377, 48
    %v867 = vpop.permute.xlu0 %866
    %v870 = vsel %vm383, %v865, 0
    %872 = vmatprep.subr.mxu0 0.0
    %873 = vmatpush1.msra.mxu0 %v867
    %874 = vmatprep.subr.mxu0 0.0
    %875 = vmatpush1.msra.mxu0 0.0
    %876 = vmatprep.subr.mxu0 0.0
    %877 = vmatpush1.msra.mxu0 0.0
    %878 = vmatprep.subr.mxu0 0.0
    %879 = vmatpush1.msra.mxu0 0.0
    %880 = vmatprep.subr.mxu0 0.0
    %881 = vmatpush1.msra.mxu0 0.0
    %882 = vmatprep.subr.mxu0 0.0
    %883 = vmatpush1.msra.mxu0 0.0
    %884 = vmatprep.subr.mxu0 0.0
    %885 = vmatpush1.msra.mxu0 0.0
    %886 = vmatprep.subr.mxu0 0.0
    %887 = vmatpush1.msra.mxu0 0.0
    %888 = vmatprep.subr.mxu0 0.0
    %889 = vmatpush1.msra.mxu0 0.0
    %890 = vmatprep.subr.mxu0 0.0
    %891 = vmatpush1.msra.mxu0 0.0
    %892 = vmatprep.subr.mxu0 0.0
    %893 = vmatpush1.msra.mxu0 0.0
    %894 = vmatprep.subr.mxu0 0.0
    %895 = vmatpush1.msra.mxu0 0.0
    %896 = vmatprep.subr.mxu0 0.0
    %897 = vmatpush1.msra.mxu0 0.0
    %898 = vmatprep.subr.mxu0 0.0
    %899 = vmatpush1.msra.mxu0 0.0
    %900 = vmatprep.subr.mxu0 0.0
    %901 = vmatpush1.msra.mxu0 0.0
    %902 = vmatprep.subr.mxu0 0.0
    %903 = vmatpush1.msra.mxu0 0.0
    %904 = vmatprep.subr.mxu0 0.0
    %905 = vmatpush1.msra.mxu0 0.0
    %906 = vmatprep.subr.mxu0 0.0
    %907 = vmatpush1.msra.mxu0 0.0
    %908 = vmatprep.subr.mxu0 0.0
    %909 = vmatpush1.msra.mxu0 0.0
    %910 = vmatprep.subr.mxu0 0.0
    %911 = vmatpush1.msra.mxu0 0.0
    %912 = vmatprep.subr.mxu0 0.0
    %913 = vmatpush1.msra.mxu0 0.0
    %914 = vmatprep.subr.mxu0 0.0
    %915 = vmatpush1.msra.mxu0 0.0
    %916 = vmatprep.subr.mxu0 0.0
    %917 = vmatpush1.msra.mxu0 0.0
    %918 = vmatprep.subr.mxu0 0.0
    %919 = vmatpush1.msra.mxu0 0.0
    %920 = vmatprep.subr.mxu0 0.0
    %921 = vmatpush1.msra.mxu0 0.0
    %922 = vmatprep.subr.mxu0 0.0
    %923 = vmatpush1.msra.mxu0 0.0
    %924 = vmatprep.subr.mxu0 0.0
    %925 = vmatpush1.msra.mxu0 0.0
    %926 = vmatprep.subr.mxu0 0.0
    %927 = vmatpush1.msra.mxu0 0.0
    %928 = vmatprep.subr.mxu0 0.0
    %929 = vmatpush1.msra.mxu0 0.0
    %930 = vmatprep.subr.mxu0 0.0
    %931 = vmatpush1.msra.mxu0 0.0
    %932 = vmatprep.subr.mxu0 0.0
    %933 = vmatpush1.msra.mxu0 0.0
    %934 = vmatprep.subr.mxu0 0.0
    %935 = vmatpush1.msra.mxu0 0.0
    %936 = vmatprep.mubr.f32.mxu0 0.0
    %937 = vmatmul.mubr.f32.gmra.mrb[0].mxu0 %v870
    %v938 = vpop.f32.mrb[0].mxu0
    %v939 = vadd.f32 0.0, %v938
    %v940 = vpop.f32.mrb[0].mxu0
    %941 = vdwg.mxu0
    %942 = vxpose.xlu0.b32.start [1/16] %v939, 128
    %943 = vxpose.xlu0.b32.cont [2/16] 0.0, 128
    %944 = vxpose.xlu0.b32.cont [3/16] 0.0, 128
    %945 = vxpose.xlu0.b32.cont [4/16] 0.0, 128
    %946 = vxpose.xlu0.b32.cont [5/16] 0.0, 128
    %947 = vxpose.xlu0.b32.cont [6/16] 0.0, 128
    %948 = vxpose.xlu0.b32.cont [7/16] 0.0, 128
    %949 = vxpose.xlu0.b32.cont [8/16] 0.0, 128
    %950 = vxpose.xlu0.b32.cont [9/16] 0.0, 128
    %951 = vxpose.xlu0.b32.cont [10/16] 0.0, 128
    %952 = vxpose.xlu0.b32.cont [11/16] 0.0, 128
    %953 = vxpose.xlu0.b32.cont [12/16] 0.0, 128
    %954 = vxpose.xlu0.b32.cont [13/16] 0.0, 128
    %955 = vxpose.xlu0.b32.cont [14/16] 0.0, 128
    %956 = vxpose.xlu0.b32.cont [15/16] 0.0, 128
    %957 = vxpose.xlu0.b32.end [16/16] 0.0, 128
    %v958 = vpop.trf.xlu0
    %v959 = vpop.trf.xlu0
    %v960 = vpop.trf.xlu0
    %v961 = vpop.trf.xlu0
    %v962 = vpop.trf.xlu0
    %v963 = vpop.trf.xlu0
    %v964 = vpop.trf.xlu0
    %v965 = vpop.trf.xlu0
    %v966 = vpop.trf.xlu0
    %v967 = vpop.trf.xlu0
    %v968 = vpop.trf.xlu0
    %v969 = vpop.trf.xlu0
    %v970 = vpop.trf.xlu0
    %v971 = vpop.trf.xlu0
    %v972 = vpop.trf.xlu0
    %v973 = vpop.trf.xlu0
    %974 = vrot.lane.b32.xlu0 %v377, 104
    %v975 = vpop.permute.xlu0 %974
    %976 = vrot.lane.b32.xlu0 %v377, 72
    %v977 = vpop.permute.xlu0 %976
    %v978 = vsel %vm383, %v975, 0
    %v980 = vsel %vm383, %v977, 0
    %982 = vmatprep.subr.mxu0 0.0
    %983 = vmatpush1.xpose.msra.mxu0 %v980
    %984 = vmatprep.subr.mxu0 0.0
    %985 = vmatpush1.xpose.msra.mxu0 0.0
    %986 = vmatprep.subr.mxu0 0.0
    %987 = vmatpush1.xpose.msra.mxu0 0.0
    %988 = vmatprep.subr.mxu0 0.0
    %989 = vmatpush1.xpose.msra.mxu0 0.0
    %990 = vmatprep.subr.mxu0 0.0
    %991 = vmatpush1.xpose.msra.mxu0 0.0
    %992 = vmatprep.subr.mxu0 0.0
    %993 = vmatpush1.xpose.msra.mxu0 0.0
    %994 = vmatprep.subr.mxu0 0.0
    %995 = vmatpush1.xpose.msra.mxu0 0.0
    %996 = vmatprep.subr.mxu0 0.0
    %997 = vmatpush1.xpose.msra.mxu0 0.0
    %998 = vmatprep.subr.mxu0 0.0
    %999 = vmatpush1.xpose.msra.mxu0 0.0
    %1000 = vmatprep.subr.mxu0 0.0
    %1001 = vmatpush1.xpose.msra.mxu0 0.0
    %1002 = vmatprep.subr.mxu0 0.0
    %1003 = vmatpush1.xpose.msra.mxu0 0.0
    %1004 = vmatprep.subr.mxu0 0.0
    %1005 = vmatpush1.xpose.msra.mxu0 0.0
    %1006 = vmatprep.subr.mxu0 0.0
    %1007 = vmatpush1.xpose.msra.mxu0 0.0
    %1008 = vmatprep.subr.mxu0 0.0
    %1009 = vmatpush1.xpose.msra.mxu0 0.0
    %1010 = vmatprep.subr.mxu0 0.0
    %1011 = vmatpush1.xpose.msra.mxu0 0.0
    %1012 = vmatprep.subr.mxu0 0.0
    %1013 = vmatpush1.xpose.msra.mxu0 0.0
    %1014 = vmatprep.subr.mxu0 0.0
    %1015 = vmatpush1.xpose.msra.mxu0 0.0
    %1016 = vmatprep.subr.mxu0 0.0
    %1017 = vmatpush1.xpose.msra.mxu0 0.0
    %1018 = vmatprep.subr.mxu0 0.0
    %1019 = vmatpush1.xpose.msra.mxu0 0.0
    %1020 = vmatprep.subr.mxu0 0.0
    %1021 = vmatpush1.xpose.msra.mxu0 0.0
    %1022 = vmatprep.subr.mxu0 0.0
    %1023 = vmatpush1.xpose.msra.mxu0 0.0
    %1024 = vmatprep.subr.mxu0 0.0
    %1025 = vmatpush1.xpose.msra.mxu0 0.0
    %1026 = vmatprep.subr.mxu0 0.0
    %1027 = vmatpush1.xpose.msra.mxu0 0.0
    %1028 = vmatprep.subr.mxu0 0.0
    %1029 = vmatpush1.xpose.msra.mxu0 0.0
    %1030 = vmatprep.subr.mxu0 0.0
    %1031 = vmatpush1.xpose.msra.mxu0 0.0
    %1032 = vmatprep.subr.mxu0 0.0
    %1033 = vmatpush1.xpose.msra.mxu0 0.0
    %1034 = vmatprep.subr.mxu0 0.0
    %1035 = vmatpush1.xpose.msra.mxu0 0.0
    %1036 = vmatprep.subr.mxu0 0.0
    %1037 = vmatpush1.xpose.msra.mxu0 0.0
    %1038 = vmatprep.subr.mxu0 0.0
    %1039 = vmatpush1.xpose.msra.mxu0 0.0
    %1040 = vmatprep.subr.mxu0 0.0
    %1041 = vmatpush1.xpose.msra.mxu0 0.0
    %1042 = vmatprep.subr.mxu0 0.0
    %1043 = vmatpush1.xpose.msra.mxu0 0.0
    %1044 = vmatprep.subr.mxu0 0.0
    %1045 = vmatpush1.xpose.msra.mxu0 0.0
    %1046 = vmatprep.mubr.f32.mxu0 0.0
    %1047 = vmatmul.mubr.f32.gmra.mrb[0].mxu0 %v978
    %v1048 = vpop.f32.mrb[0].mxu0
    %v1049 = vadd.f32 0.0, %v1048
    %v1050 = vpop.f32.mrb[0].mxu0
    %1051 = vdwg.mxu0
    %v1052 = vmul.f32 %v1049, 0.35355338
    %v1053 = vsel %vm383, %v1052, -inf
    %1054 = vmax.xlane.f32.xlu0 %v1053
    %v1055 = vpop.xlane.xlu0 %1054
    %v1056 = vsub.f32 %v1052, %v1055
    %v1057 = vmul.f32 %v1056, 1.442695
    %v1058 = vpow.pop %v1057
    %v1059 = vsel %vm383, %v1058, 0.0
    %1060 = vadd.xlane.f32.xlu0 %v1059
    %v1061 = vpop.xlane.xlu0 %1060
    %v1062 = vrcp.pop %v1061
    %v1063 = vmul.f32 %v1058, %v1062
    %1064 = vrot.lane.b32.xlu0 %v377, 40
    %v1065 = vpop.permute.xlu0 %1064
    %v1068 = vsel %vm383, %v1063, 0
    %1070 = vmatprep.subr.mxu0 0.0
    %1071 = vmatpush1.msra.mxu0 %v1065
    %1072 = vmatprep.subr.mxu0 0.0
    %1073 = vmatpush1.msra.mxu0 0.0
    %1074 = vmatprep.subr.mxu0 0.0
    %1075 = vmatpush1.msra.mxu0 0.0
    %1076 = vmatprep.subr.mxu0 0.0
    %1077 = vmatpush1.msra.mxu0 0.0
    %1078 = vmatprep.subr.mxu0 0.0
    %1079 = vmatpush1.msra.mxu0 0.0
    %1080 = vmatprep.subr.mxu0 0.0
    %1081 = vmatpush1.msra.mxu0 0.0
    %1082 = vmatprep.subr.mxu0 0.0
    %1083 = vmatpush1.msra.mxu0 0.0
    %1084 = vmatprep.subr.mxu0 0.0
    %1085 = vmatpush1.msra.mxu0 0.0
    %1086 = vmatprep.subr.mxu0 0.0
    %1087 = vmatpush1.msra.mxu0 0.0
    %1088 = vmatprep.subr.mxu0 0.0
    %1089 = vmatpush1.msra.mxu0 0.0
    %1090 = vmatprep.subr.mxu0 0.0
    %1091 = vmatpush1.msra.mxu0 0.0
    %1092 = vmatprep.subr.mxu0 0.0
    %1093 = vmatpush1.msra.mxu0 0.0
    %1094 = vmatprep.subr.mxu0 0.0
    %1095 = vmatpush1.msra.mxu0 0.0
    %1096 = vmatprep.subr.mxu0 0.0
    %1097 = vmatpush1.msra.mxu0 0.0
    %1098 = vmatprep.subr.mxu0 0.0
    %1099 = vmatpush1.msra.mxu0 0.0
    %1100 = vmatprep.subr.mxu0 0.0
    %1101 = vmatpush1.msra.mxu0 0.0
    %1102 = vmatprep.subr.mxu0 0.0
    %1103 = vmatpush1.msra.mxu0 0.0
    %1104 = vmatprep.subr.mxu0 0.0
    %1105 = vmatpush1.msra.mxu0 0.0
    %1106 = vmatprep.subr.mxu0 0.0
    %1107 = vmatpush1.msra.mxu0 0.0
    %1108 = vmatprep.subr.mxu0 0.0
    %1109 = vmatpush1.msra.mxu0 0.0
    %1110 = vmatprep.subr.mxu0 0.0
    %1111 = vmatpush1.msra.mxu0 0.0
    %1112 = vmatprep.subr.mxu0 0.0
    %1113 = vmatpush1.msra.mxu0 0.0
    %1114 = vmatprep.subr.mxu0 0.0
    %1115 = vmatpush1.msra.mxu0 0.0
    %1116 = vmatprep.subr.mxu0 0.0
    %1117 = vmatpush1.msra.mxu0 0.0
    %1118 = vmatprep.subr.mxu0 0.0
    %1119 = vmatpush1.msra.mxu0 0.0
    %1120 = vmatprep.subr.mxu0 0.0
    %1121 = vmatpush1.msra.mxu0 0.0
    %1122 = vmatprep.subr.mxu0 0.0
    %1123 = vmatpush1.msra.mxu0 0.0
    %1124 = vmatprep.subr.mxu0 0.0
    %1125 = vmatpush1.msra.mxu0 0.0
    %1126 = vmatprep.subr.mxu0 0.0
    %1127 = vmatpush1.msra.mxu0 0.0
    %1128 = vmatprep.subr.mxu0 0.0
    %1129 = vmatpush1.msra.mxu0 0.0
    %1130 = vmatprep.subr.mxu0 0.0
    %1131 = vmatpush1.msra.mxu0 0.0
    %1132 = vmatprep.subr.mxu0 0.0
    %1133 = vmatpush1.msra.mxu0 0.0
    %1134 = vmatprep.mubr.f32.mxu0 0.0
    %1135 = vmatmul.mubr.f32.gmra.mrb[0].mxu0 %v1068
    %v1136 = vpop.f32.mrb[0].mxu0
    %v1137 = vadd.f32 0.0, %v1136
    %v1138 = vpop.f32.mrb[0].mxu0
    %1139 = vdwg.mxu0
    %1140 = vxpose.xlu0.b32.start [1/16] %v1137, 128
    %1141 = vxpose.xlu0.b32.cont [2/16] 0.0, 128
    %1142 = vxpose.xlu0.b32.cont [3/16] 0.0, 128
    %1143 = vxpose.xlu0.b32.cont [4/16] 0.0, 128
    %1144 = vxpose.xlu0.b32.cont [5/16] 0.0, 128
    %1145 = vxpose.xlu0.b32.cont [6/16] 0.0, 128
    %1146 = vxpose.xlu0.b32.cont [7/16] 0.0, 128
    %1147 = vxpose.xlu0.b32.cont [8/16] 0.0, 128
    %1148 = vxpose.xlu0.b32.cont [9/16] 0.0, 128
    %1149 = vxpose.xlu0.b32.cont [10/16] 0.0, 128
    %1150 = vxpose.xlu0.b32.cont [11/16] 0.0, 128
    %1151 = vxpose.xlu0.b32.cont [12/16] 0.0, 128
    %1152 = vxpose.xlu0.b32.cont [13/16] 0.0, 128
    %1153 = vxpose.xlu0.b32.cont [14/16] 0.0, 128
    %1154 = vxpose.xlu0.b32.cont [15/16] 0.0, 128
    %1155 = vxpose.xlu0.b32.end [16/16] 0.0, 128
    %v1156 = vpop.trf.xlu0
    %v1157 = vpop.trf.xlu0
    %v1158 = vpop.trf.xlu0
    %v1159 = vpop.trf.xlu0
    %v1160 = vpop.trf.xlu0
    %v1161 = vpop.trf.xlu0
    %v1162 = vpop.trf.xlu0
    %v1163 = vpop.trf.xlu0
    %v1164 = vpop.trf.xlu0
    %v1165 = vpop.trf.xlu0
    %v1166 = vpop.trf.xlu0
    %v1167 = vpop.trf.xlu0
    %v1168 = vpop.trf.xlu0
    %v1169 = vpop.trf.xlu0
    %v1170 = vpop.trf.xlu0
    %v1171 = vpop.trf.xlu0
    %v1172 = vlaneseq
    %v1173 = vshrl.u32 %v1172, 7
    %v1174 = vlaneseq
    %v1175 = vand.u32 %v1174, 127
    %v1176 = vmul.u32 %v1173, 4
    %vm1177 = vcmp.eq.s32.totalorder %v1175, %v1176
    %v1178 = vsel %vm1177, 1.0, 0.0
    %v1180 = vsel %vm225, %v1178, 0
    %1182 = vmatprep.subr.mxu0 0.0
    %1183 = vmatpush1.msra.mxu0 %v562
    %1184 = vmatprep.subr.mxu0 0.0
    %1185 = vmatpush1.msra.mxu0 %v760
    %1186 = vmatprep.subr.mxu0 0.0
    %1187 = vmatpush1.msra.mxu0 %v958
    %1188 = vmatprep.subr.mxu0 0.0
    %1189 = vmatpush1.msra.mxu0 %v1156
    %1190 = vmatprep.subr.mxu0 0.0
    %1191 = vmatpush1.msra.mxu0 0.0
    %1192 = vmatprep.subr.mxu0 0.0
    %1193 = vmatpush1.msra.mxu0 0.0
    %1194 = vmatprep.subr.mxu0 0.0
    %1195 = vmatpush1.msra.mxu0 0.0
    %1196 = vmatprep.subr.mxu0 0.0
    %1197 = vmatpush1.msra.mxu0 0.0
    %1198 = vmatprep.subr.mxu0 0.0
    %1199 = vmatpush1.msra.mxu0 0.0
    %1200 = vmatprep.subr.mxu0 0.0
    %1201 = vmatpush1.msra.mxu0 0.0
    %1202 = vmatprep.subr.mxu0 0.0
    %1203 = vmatpush1.msra.mxu0 0.0
    %1204 = vmatprep.subr.mxu0 0.0
    %1205 = vmatpush1.msra.mxu0 0.0
    %1206 = vmatprep.subr.mxu0 0.0
    %1207 = vmatpush1.msra.mxu0 0.0
    %1208 = vmatprep.subr.mxu0 0.0
    %1209 = vmatpush1.msra.mxu0 0.0
    %1210 = vmatprep.subr.mxu0 0.0
    %1211 = vmatpush1.msra.mxu0 0.0
    %1212 = vmatprep.subr.mxu0 0.0
    %1213 = vmatpush1.msra.mxu0 0.0
    %1214 = vmatprep.subr.mxu0 0.0
    %1215 = vmatpush1.msra.mxu0 0.0
    %1216 = vmatprep.subr.mxu0 0.0
    %1217 = vmatpush1.msra.mxu0 0.0
    %1218 = vmatprep.subr.mxu0 0.0
    %1219 = vmatpush1.msra.mxu0 0.0
    %1220 = vmatprep.subr.mxu0 0.0
    %1221 = vmatpush1.msra.mxu0 0.0
    %1222 = vmatprep.subr.mxu0 0.0
    %1223 = vmatpush1.msra.mxu0 0.0
    %1224 = vmatprep.subr.mxu0 0.0
    %1225 = vmatpush1.msra.mxu0 0.0
    %1226 = vmatprep.subr.mxu0 0.0
    %1227 = vmatpush1.msra.mxu0 0.0
    %1228 = vmatprep.subr.mxu0 0.0
    %1229 = vmatpush1.msra.mxu0 0.0
    %1230 = vmatprep.subr.mxu0 0.0
    %1231 = vmatpush1.msra.mxu0 0.0
    %1232 = vmatprep.subr.mxu0 0.0
    %1233 = vmatpush1.msra.mxu0 0.0
    %1234 = vmatprep.subr.mxu0 0.0
    %1235 = vmatpush1.msra.mxu0 0.0
    %1236 = vmatprep.subr.mxu0 0.0
    %1237 = vmatpush1.msra.mxu0 0.0
    %1238 = vmatprep.subr.mxu0 0.0
    %1239 = vmatpush1.msra.mxu0 0.0
    %1240 = vmatprep.subr.mxu0 0.0
    %1241 = vmatpush1.msra.mxu0 0.0
    %1242 = vmatprep.subr.mxu0 0.0
    %1243 = vmatpush1.msra.mxu0 0.0
    %1244 = vmatprep.subr.mxu0 0.0
    %1245 = vmatpush1.msra.mxu0 0.0
    %1246 = vmatprep.mubr.f32.mxu0 0.0
    %1247 = vmatmul.mubr.f32.gmra.mrb[0].mxu0 %v1180
    %v1248 = vpop.f32.mrb[0].mxu0
    %v1249 = vadd.f32 0.0, %v1248
    %v1250 = vpop.f32.mrb[0].mxu0
    %1251 = vdwg.mxu0
    %v1252 = vadd.s32 %v1176, 1
    %vm1253 = vcmp.eq.s32.totalorder %v1175, %v1252
    %v1254 = vsel %vm1253, 1.0, 0.0
    %v1256 = vsel %vm225, %v1254, 0
    %1258 = vmatprep.subr.mxu0 0.0
    %1259 = vmatpush1.msra.mxu0 %v562
    %1260 = vmatprep.subr.mxu0 0.0
    %1261 = vmatpush1.msra.mxu0 %v760
    %1262 = vmatprep.subr.mxu0 0.0
    %1263 = vmatpush1.msra.mxu0 %v958
    %1264 = vmatprep.subr.mxu0 0.0
    %1265 = vmatpush1.msra.mxu0 %v1156
    %1266 = vmatprep.subr.mxu0 0.0
    %1267 = vmatpush1.msra.mxu0 0.0
    %1268 = vmatprep.subr.mxu0 0.0
    %1269 = vmatpush1.msra.mxu0 0.0
    %1270 = vmatprep.subr.mxu0 0.0
    %1271 = vmatpush1.msra.mxu0 0.0
    %1272 = vmatprep.subr.mxu0 0.0
    %1273 = vmatpush1.msra.mxu0 0.0
    %1274 = vmatprep.subr.mxu0 0.0
    %1275 = vmatpush1.msra.mxu0 0.0
    %1276 = vmatprep.subr.mxu0 0.0
    %1277 = vmatpush1.msra.mxu0 0.0
    %1278 = vmatprep.subr.mxu0 0.0
    %1279 = vmatpush1.msra.mxu0 0.0
    %1280 = vmatprep.subr.mxu0 0.0
    %1281 = vmatpush1.msra.mxu0 0.0
    %1282 = vmatprep.subr.mxu0 0.0
    %1283 = vmatpush1.msra.mxu0 0.0
    %1284 = vmatprep.subr.mxu0 0.0
    %1285 = vmatpush1.msra.mxu0 0.0
    %1286 = vmatprep.subr.mxu0 0.0
    %1287 = vmatpush1.msra.mxu0 0.0
    %1288 = vmatprep.subr.mxu0 0.0
    %1289 = vmatpush1.msra.mxu0 0.0
    %1290 = vmatprep.subr.mxu0 0.0
    %1291 = vmatpush1.msra.mxu0 0.0
    %1292 = vmatprep.subr.mxu0 0.0
    %1293 = vmatpush1.msra.mxu0 0.0
    %1294 = vmatprep.subr.mxu0 0.0
    %1295 = vmatpush1.msra.mxu0 0.0
    %1296 = vmatprep.subr.mxu0 0.0
    %1297 = vmatpush1.msra.mxu0 0.0
    %1298 = vmatprep.subr.mxu0 0.0
    %1299 = vmatpush1.msra.mxu0 0.0
    %1300 = vmatprep.subr.mxu0 0.0
    %1301 = vmatpush1.msra.mxu0 0.0
    %1302 = vmatprep.subr.mxu0 0.0
    %1303 = vmatpush1.msra.mxu0 0.0
    %1304 = vmatprep.subr.mxu0 0.0
    %1305 = vmatpush1.msra.mxu0 0.0
    %1306 = vmatprep.subr.mxu0 0.0
    %1307 = vmatpush1.msra.mxu0 0.0
    %1308 = vmatprep.subr.mxu0 0.0
    %1309 = vmatpush1.msra.mxu0 0.0
    %1310 = vmatprep.subr.mxu0 0.0
    %1311 = vmatpush1.msra.mxu0 0.0
    %1312 = vmatprep.subr.mxu0 0.0
    %1313 = vmatpush1.msra.mxu0 0.0
    %1314 = vmatprep.subr.mxu0 0.0
    %1315 = vmatpush1.msra.mxu0 0.0
    %1316 = vmatprep.subr.mxu0 0.0
    %1317 = vmatpush1.msra.mxu0 0.0
    %1318 = vmatprep.subr.mxu0 0.0
    %1319 = vmatpush1.msra.mxu0 0.0
    %1320 = vmatprep.subr.mxu0 0.0
    %1321 = vmatpush1.msra.mxu0 0.0
    %1322 = vmatprep.mubr.f32.mxu0 0.0
    %1323 = vmatmul.mubr.f32.gmra.mrb[0].mxu0 %v1256
    %v1324 = vpop.f32.mrb[0].mxu0
    %v1325 = vadd.f32 0.0, %v1324
    %v1326 = vpop.f32.mrb[0].mxu0
    %1327 = vdwg.mxu0
    %v1328 = vadd.s32 %v1176, 2
    %vm1329 = vcmp.eq.s32.totalorder %v1175, %v1328
    %v1330 = vsel %vm1329, 1.0, 0.0
    %v1332 = vsel %vm225, %v1330, 0
    %1334 = vmatprep.subr.mxu0 0.0
    %1335 = vmatpush1.msra.mxu0 %v562
    %1336 = vmatprep.subr.mxu0 0.0
    %1337 = vmatpush1.msra.mxu0 %v760
    %1338 = vmatprep.subr.mxu0 0.0
    %1339 = vmatpush1.msra.mxu0 %v958
    %1340 = vmatprep.subr.mxu0 0.0
    %1341 = vmatpush1.msra.mxu0 %v1156
    %1342 = vmatprep.subr.mxu0 0.0
    %1343 = vmatpush1.msra.mxu0 0.0
    %1344 = vmatprep.subr.mxu0 0.0
    %1345 = vmatpush1.msra.mxu0 0.0
    %1346 = vmatprep.subr.mxu0 0.0
    %1347 = vmatpush1.msra.mxu0 0.0
    %1348 = vmatprep.subr.mxu0 0.0
    %1349 = vmatpush1.msra.mxu0 0.0
    %1350 = vmatprep.subr.mxu0 0.0
    %1351 = vmatpush1.msra.mxu0 0.0
    %1352 = vmatprep.subr.mxu0 0.0
    %1353 = vmatpush1.msra.mxu0 0.0
    %1354 = vmatprep.subr.mxu0 0.0
    %1355 = vmatpush1.msra.mxu0 0.0
    %1356 = vmatprep.subr.mxu0 0.0
    %1357 = vmatpush1.msra.mxu0 0.0
    %1358 = vmatprep.subr.mxu0 0.0
    %1359 = vmatpush1.msra.mxu0 0.0
    %1360 = vmatprep.subr.mxu0 0.0
    %1361 = vmatpush1.msra.mxu0 0.0
    %1362 = vmatprep.subr.mxu0 0.0
    %1363 = vmatpush1.msra.mxu0 0.0
    %1364 = vmatprep.subr.mxu0 0.0
    %1365 = vmatpush1.msra.mxu0 0.0
    %1366 = vmatprep.subr.mxu0 0.0
    %1367 = vmatpush1.msra.mxu0 0.0
    %1368 = vmatprep.subr.mxu0 0.0
    %1369 = vmatpush1.msra.mxu0 0.0
    %1370 = vmatprep.subr.mxu0 0.0
    %1371 = vmatpush1.msra.mxu0 0.0
    %1372 = vmatprep.subr.mxu0 0.0
    %1373 = vmatpush1.msra.mxu0 0.0
    %1374 = vmatprep.subr.mxu0 0.0
    %1375 = vmatpush1.msra.mxu0 0.0
    %1376 = vmatprep.subr.mxu0 0.0
    %1377 = vmatpush1.msra.mxu0 0.0
    %1378 = vmatprep.subr.mxu0 0.0
    %1379 = vmatpush1.msra.mxu0 0.0
    %1380 = vmatprep.subr.mxu0 0.0
    %1381 = vmatpush1.msra.mxu0 0.0
    %1382 = vmatprep.subr.mxu0 0.0
    %1383 = vmatpush1.msra.mxu0 0.0
    %1384 = vmatprep.subr.mxu0 0.0
    %1385 = vmatpush1.msra.mxu0 0.0
    %1386 = vmatprep.subr.mxu0 0.0
    %1387 = vmatpush1.msra.mxu0 0.0
    %1388 = vmatprep.subr.mxu0 0.0
    %1389 = vmatpush1.msra.mxu0 0.0
    %1390 = vmatprep.subr.mxu0 0.0
    %1391 = vmatpush1.msra.mxu0 0.0
    %1392 = vmatprep.subr.mxu0 0.0
    %1393 = vmatpush1.msra.mxu0 0.0
    %1394 = vmatprep.subr.mxu0 0.0
    %1395 = vmatpush1.msra.mxu0 0.0
    %1396 = vmatprep.subr.mxu0 0.0
    %1397 = vmatpush1.msra.mxu0 0.0
    %1398 = vmatprep.mubr.f32.mxu0 0.0
    %1399 = vmatmul.mubr.f32.gmra.mrb[0].mxu0 %v1332
    %v1400 = vpop.f32.mrb[0].mxu0
    %v1401 = vadd.f32 0.0, %v1400
    %v1402 = vpop.f32.mrb[0].mxu0
    %1403 = vdwg.mxu0
    %v1404 = vadd.s32 %v1176, 3
    %vm1405 = vcmp.eq.s32.totalorder %v1175, %v1404
    %v1406 = vsel %vm1405, 1.0, 0.0
    %v1408 = vsel %vm225, %v1406, 0
    %1410 = vmatprep.subr.mxu0 0.0
    %1411 = vmatpush1.msra.mxu0 %v562
    %1412 = vmatprep.subr.mxu0 0.0
    %1413 = vmatpush1.msra.mxu0 %v760
    %1414 = vmatprep.subr.mxu0 0.0
    %1415 = vmatpush1.msra.mxu0 %v958
    %1416 = vmatprep.subr.mxu0 0.0
    %1417 = vmatpush1.msra.mxu0 %v1156
    %1418 = vmatprep.subr.mxu0 0.0
    %1419 = vmatpush1.msra.mxu0 0.0
    %1420 = vmatprep.subr.mxu0 0.0
    %1421 = vmatpush1.msra.mxu0 0.0
    %1422 = vmatprep.subr.mxu0 0.0
    %1423 = vmatpush1.msra.mxu0 0.0
    %1424 = vmatprep.subr.mxu0 0.0
    %1425 = vmatpush1.msra.mxu0 0.0
    %1426 = vmatprep.subr.mxu0 0.0
    %1427 = vmatpush1.msra.mxu0 0.0
    %1428 = vmatprep.subr.mxu0 0.0
    %1429 = vmatpush1.msra.mxu0 0.0
    %1430 = vmatprep.subr.mxu0 0.0
    %1431 = vmatpush1.msra.mxu0 0.0
    %1432 = vmatprep.subr.mxu0 0.0
    %1433 = vmatpush1.msra.mxu0 0.0
    %1434 = vmatprep.subr.mxu0 0.0
    %1435 = vmatpush1.msra.mxu0 0.0
    %1436 = vmatprep.subr.mxu0 0.0
    %1437 = vmatpush1.msra.mxu0 0.0
    %1438 = vmatprep.subr.mxu0 0.0
    %1439 = vmatpush1.msra.mxu0 0.0
    %1440 = vmatprep.subr.mxu0 0.0
    %1441 = vmatpush1.msra.mxu0 0.0
    %1442 = vmatprep.subr.mxu0 0.0
    %1443 = vmatpush1.msra.mxu0 0.0
    %1444 = vmatprep.subr.mxu0 0.0
    %1445 = vmatpush1.msra.mxu0 0.0
    %1446 = vmatprep.subr.mxu0 0.0
    %1447 = vmatpush1.msra.mxu0 0.0
    %1448 = vmatprep.subr.mxu0 0.0
    %1449 = vmatpush1.msra.mxu0 0.0
    %1450 = vmatprep.subr.mxu0 0.0
    %1451 = vmatpush1.msra.mxu0 0.0
    %1452 = vmatprep.subr.mxu0 0.0
    %1453 = vmatpush1.msra.mxu0 0.0
    %1454 = vmatprep.subr.mxu0 0.0
    %1455 = vmatpush1.msra.mxu0 0.0
    %1456 = vmatprep.subr.mxu0 0.0
    %1457 = vmatpush1.msra.mxu0 0.0
    %1458 = vmatprep.subr.mxu0 0.0
    %1459 = vmatpush1.msra.mxu0 0.0
    %1460 = vmatprep.subr.mxu0 0.0
    %1461 = vmatpush1.msra.mxu0 0.0
    %1462 = vmatprep.subr.mxu0 0.0
    %1463 = vmatpush1.msra.mxu0 0.0
    %1464 = vmatprep.subr.mxu0 0.0
    %1465 = vmatpush1.msra.mxu0 0.0
    %1466 = vmatprep.subr.mxu0 0.0
    %1467 = vmatpush1.msra.mxu0 0.0
    %1468 = vmatprep.subr.mxu0 0.0
    %1469 = vmatpush1.msra.mxu0 0.0
    %1470 = vmatprep.subr.mxu0 0.0
    %1471 = vmatpush1.msra.mxu0 0.0
    %1472 = vmatprep.subr.mxu0 0.0
    %1473 = vmatpush1.msra.mxu0 0.0
    %1474 = vmatprep.mubr.f32.mxu0 0.0
    %1475 = vmatmul.mubr.f32.gmra.mrb[0].mxu0 %v1408
    %v1476 = vpop.f32.mrb[0].mxu0
    %v1477 = vadd.f32 0.0, %v1476
    %v1478 = vpop.f32.mrb[0].mxu0
    %1479 = vdwg.mxu0
    %1481 = vrot.lane.b32.xlu0 %v1325, 8
    %v1482 = vpop.permute.xlu0 %1481
    %1485 = vrot.lane.b32.xlu0 %v1401, 16
    %v1486 = vpop.permute.xlu0 %1485
    %1489 = vrot.lane.b32.xlu0 %v1477, 24
    %v1490 = vpop.permute.xlu0 %1489
    %v1492 = vsel %vm383, %v1249, %v1482
    %v1493 = vsel %vm151, %v1492, %v1486
    %vm1494 = vcmask 195584
    %v1495 = vsel %vm1494, %v1493, %v1490
    %v1496 = vadd.f32 %v1495, %v306
    %v1497 = vsel %vm225, %v1496, 0.0
    %1498 = vadd.xlane.f32.xlu0 %v1497
    %v1499 = vpop.xlane.xlu0 %1498
    %v1500 = vrcp.pop 32.0
    %v1501 = vmul.f32 %v1499, %v1500
    %v1502 = vsub.f32 %v1496, %v1501
    %v1503 = vmul.f32 %v1502, %v1502
    %v1504 = vsel %vm225, %v1503, 0.0
    %1505 = vadd.xlane.f32.xlu0 %v1504
    %v1506 = vpop.xlane.xlu0 %1505
    %v1507 = vmul.f32 %v1506, %v1500
    %v1508 = vadd.f32 %v1507, 1e-05
    %v1509 = vrsqrt.pop %v1508
    %v1510 = vmul.f32 %v1502, %v1509
    %v1511 = vlaneseq
    %v1512 = vshrl.u32 %v1511, 7
    %v1513 = vsub.s32 0, %v1512
    %v1514 = vrot.slane %v82, %v1513
    %v1515 = vmul.f32 %v1510, %v1514
    %v1516 = vlaneseq
    %v1517 = vshrl.u32 %v1516, 7
    %v1518 = vsub.s32 0, %v1517
    %v1519 = vrot.slane %v83, %v1518
    %v1520 = vadd.f32 %v1515, %v1519
    %v1521 = vlaneseq
    %v1522 = vshrl.u32 %v1521, 7
    %v1523 = vsub.s32 0, %v1522
    %v1524 = vrot.slane %v84, %v1523
    %1529 = vrot.lane.b32.xlu0 %v71, 32
    %v1530 = vpop.permute.xlu0 %1529
    %1531 = vrot.lane.b32.xlu0 %v72, 32
    %v1532 = vpop.permute.xlu0 %1531
    %1533 = vrot.lane.b32.xlu0 %v73, 32
    %v1534 = vpop.permute.xlu0 %1533
    %1535 = vrot.lane.b32.xlu0 %v74, 32
    %v1536 = vpop.permute.xlu0 %1535
    %v1542 = vsel %vm225, %v1520, 0
    %1544 = vmatprep.subr.mxu0 0.0
    %1545 = vmatpush1.msra.mxu0 %v1530
    %1546 = vmatprep.subr.mxu0 0.0
    %1547 = vmatpush1.msra.mxu0 %v1532
    %1548 = vmatprep.subr.mxu0 0.0
    %1549 = vmatpush1.msra.mxu0 %v1534
    %1550 = vmatprep.subr.mxu0 0.0
    %1551 = vmatpush1.msra.mxu0 %v1536
    %1552 = vmatprep.subr.mxu0 0.0
    %1553 = vmatpush1.msra.mxu0 0.0
    %1554 = vmatprep.subr.mxu0 0.0
    %1555 = vmatpush1.msra.mxu0 0.0
    %1556 = vmatprep.subr.mxu0 0.0
    %1557 = vmatpush1.msra.mxu0 0.0
    %1558 = vmatprep.subr.mxu0 0.0
    %1559 = vmatpush1.msra.mxu0 0.0
    %1560 = vmatprep.subr.mxu0 0.0
    %1561 = vmatpush1.msra.mxu0 0.0
    %1562 = vmatprep.subr.mxu0 0.0
    %1563 = vmatpush1.msra.mxu0 0.0
    %1564 = vmatprep.subr.mxu0 0.0
    %1565 = vmatpush1.msra.mxu0 0.0
    %1566 = vmatprep.subr.mxu0 0.0
    %1567 = vmatpush1.msra.mxu0 0.0
    %1568 = vmatprep.subr.mxu0 0.0
    %1569 = vmatpush1.msra.mxu0 0.0
    %1570 = vmatprep.subr.mxu0 0.0
    %1571 = vmatpush1.msra.mxu0 0.0
    %1572 = vmatprep.subr.mxu0 0.0
    %1573 = vmatpush1.msra.mxu0 0.0
    %1574 = vmatprep.subr.mxu0 0.0
    %1575 = vmatpush1.msra.mxu0 0.0
    %1576 = vmatprep.subr.mxu0 0.0
    %1577 = vmatpush1.msra.mxu0 0.0
    %1578 = vmatprep.subr.mxu0 0.0
    %1579 = vmatpush1.msra.mxu0 0.0
    %1580 = vmatprep.subr.mxu0 0.0
    %1581 = vmatpush1.msra.mxu0 0.0
    %1582 = vmatprep.subr.mxu0 0.0
    %1583 = vmatpush1.msra.mxu0 0.0
    %1584 = vmatprep.subr.mxu0 0.0
    %1585 = vmatpush1.msra.mxu0 0.0
    %1586 = vmatprep.subr.mxu0 0.0
    %1587 = vmatpush1.msra.mxu0 0.0
    %1588 = vmatprep.subr.mxu0 0.0
    %1589 = vmatpush1.msra.mxu0 0.0
    %1590 = vmatprep.subr.mxu0 0.0
    %1591 = vmatpush1.msra.mxu0 0.0
    %1592 = vmatprep.subr.mxu0 0.0
    %1593 = vmatpush1.msra.mxu0 0.0
    %1594 = vmatprep.subr.mxu0 0.0
    %1595 = vmatpush1.msra.mxu0 0.0
    %1596 = vmatprep.subr.mxu0 0.0
    %1597 = vmatpush1.msra.mxu0 0.0
    %1598 = vmatprep.subr.mxu0 0.0
    %1599 = vmatpush1.msra.mxu0 0.0
    %1600 = vmatprep.subr.mxu0 0.0
    %1601 = vmatpush1.msra.mxu0 0.0
    %1602 = vmatprep.subr.mxu0 0.0
    %1603 = vmatpush1.msra.mxu0 0.0
    %1604 = vmatprep.subr.mxu0 0.0
    %1605 = vmatpush1.msra.mxu0 0.0
    %1606 = vmatprep.subr.mxu0 0.0
    %1607 = vmatpush1.msra.mxu0 0.0
    %1608 = vmatprep.mubr.f32.mxu0 0.0
    %1609 = vmatmul.mubr.f32.gmra.mrb[0].mxu0 %v1542
    %v1610 = vpop.f32.mrb[0].mxu0
    %v1611 = vadd.f32 %v1524, %v1610
    %v1612 = vpop.f32.mrb[0].mxu0
    %1613 = vdwg.mxu0
    %v1614 = vadd.f32 %v1611, %v1520
    %v1615 = vsel %vm225, %v1614, 0.0
    %1616 = vadd.xlane.f32.xlu0 %v1615
    %v1617 = vpop.xlane.xlu0 %1616
    %v1618 = vmul.f32 %v1617, %v1500
    %v1619 = vsub.f32 %v1614, %v1618
    %v1620 = vmul.f32 %v1619, %v1619
    %v1621 = vsel %vm225, %v1620, 0.0
    %1622 = vadd.xlane.f32.xlu0 %v1621
    %v1623 = vpop.xlane.xlu0 %1622
    %v1624 = vmul.f32 %v1623, %v1500
    %v1625 = vadd.f32 %v1624, 1e-05
    %v1626 = vrsqrt.pop %v1625
    %v1627 = vmul.f32 %v1619, %v1626
    %v1628 = vlaneseq
    %v1629 = vshrl.u32 %v1628, 7
    %v1630 = vsub.s32 0, %v1629
    %v1631 = vrot.slane %v85, %v1630
    %v1632 = vmul.f32 %v1627, %v1631
    %v1633 = vlaneseq
    %v1634 = vshrl.u32 %v1633, 7
    %v1635 = vsub.s32 0, %v1634
    %v1636 = vrot.slane %v86, %v1635
    %v1637 = vadd.f32 %v1632, %v1636
    %v1638 = vlaneseq
    %v1639 = vshrl.u32 %v1638, 7
    %v1640 = vsub.s32 0, %v1639
    %v1641 = vrot.slane %v88, %v1640
    %1646 = vrot.lane.b32.xlu0 %v75, 64
    %v1647 = vpop.permute.xlu0 %1646
    %1648 = vrot.lane.b32.xlu0 %v76, 64
    %v1649 = vpop.permute.xlu0 %1648
    %1650 = vrot.lane.b32.xlu0 %v77, 64
    %v1651 = vpop.permute.xlu0 %1650
    %1652 = vrot.lane.b32.xlu0 %v78, 64
    %v1653 = vpop.permute.xlu0 %1652
    %v1659 = vsel %vm225, %v1637, 0
    %1661 = vmatprep.subr.mxu0 0.0
    %1662 = vmatpush1.msra.mxu0 %v1647
    %1663 = vmatprep.subr.mxu0 0.0
    %1664 = vmatpush1.msra.mxu0 %v1649
    %1665 = vmatprep.subr.mxu0 0.0
    %1666 = vmatpush1.msra.mxu0 %v1651
    %1667 = vmatprep.subr.mxu0 0.0
    %1668 = vmatpush1.msra.mxu0 %v1653
    %1669 = vmatprep.subr.mxu0 0.0
    %1670 = vmatpush1.msra.mxu0 0.0
    %1671 = vmatprep.subr.mxu0 0.0
    %1672 = vmatpush1.msra.mxu0 0.0
    %1673 = vmatprep.subr.mxu0 0.0
    %1674 = vmatpush1.msra.mxu0 0.0
    %1675 = vmatprep.subr.mxu0 0.0
    %1676 = vmatpush1.msra.mxu0 0.0
    %1677 = vmatprep.subr.mxu0 0.0
    %1678 = vmatpush1.msra.mxu0 0.0
    %1679 = vmatprep.subr.mxu0 0.0
    %1680 = vmatpush1.msra.mxu0 0.0
    %1681 = vmatprep.subr.mxu0 0.0
    %1682 = vmatpush1.msra.mxu0 0.0
    %1683 = vmatprep.subr.mxu0 0.0
    %1684 = vmatpush1.msra.mxu0 0.0
    %1685 = vmatprep.subr.mxu0 0.0
    %1686 = vmatpush1.msra.mxu0 0.0
    %1687 = vmatprep.subr.mxu0 0.0
    %1688 = vmatpush1.msra.mxu0 0.0
    %1689 = vmatprep.subr.mxu0 0.0
    %1690 = vmatpush1.msra.mxu0 0.0
    %1691 = vmatprep.subr.mxu0 0.0
    %1692 = vmatpush1.msra.mxu0 0.0
    %1693 = vmatprep.subr.mxu0 0.0
    %1694 = vmatpush1.msra.mxu0 0.0
    %1695 = vmatprep.subr.mxu0 0.0
    %1696 = vmatpush1.msra.mxu0 0.0
    %1697 = vmatprep.subr.mxu0 0.0
    %1698 = vmatpush1.msra.mxu0 0.0
    %1699 = vmatprep.subr.mxu0 0.0
    %1700 = vmatpush1.msra.mxu0 0.0
    %1701 = vmatprep.subr.mxu0 0.0
    %1702 = vmatpush1.msra.mxu0 0.0
    %1703 = vmatprep.subr.mxu0 0.0
    %1704 = vmatpush1.msra.mxu0 0.0
    %1705 = vmatprep.subr.mxu0 0.0
    %1706 = vmatpush1.msra.mxu0 0.0
    %1707 = vmatprep.subr.mxu0 0.0
    %1708 = vmatpush1.msra.mxu0 0.0
    %1709 = vmatprep.subr.mxu0 0.0
    %1710 = vmatpush1.msra.mxu0 0.0
    %1711 = vmatprep.subr.mxu0 0.0
    %1712 = vmatpush1.msra.mxu0 0.0
    %1713 = vmatprep.subr.mxu0 0.0
    %1714 = vmatpush1.msra.mxu0 0.0
    %1715 = vmatprep.subr.mxu0 0.0
    %1716 = vmatpush1.msra.mxu0 0.0
    %1717 = vmatprep.subr.mxu0 0.0
    %1718 = vmatpush1.msra.mxu0 0.0
    %1719 = vmatprep.subr.mxu0 0.0
    %1720 = vmatpush1.msra.mxu0 0.0
    %1721 = vmatprep.subr.mxu0 0.0
    %1722 = vmatpush1.msra.mxu0 0.0
    %1723 = vmatprep.subr.mxu0 0.0
    %1724 = vmatpush1.msra.mxu0 0.0
    %1725 = vmatprep.mubr.f32.mxu0 0.0
    %1726 = vmatmul.mubr.f32.gmra.mrb[0].mxu0 %v1659
    %v1727 = vpop.f32.mrb[0].mxu0
    %v1728 = vadd.f32 %v1641, %v1727
    %v1729 = vpop.f32.mrb[0].mxu0
    %1730 = vdwg.mxu0
    %v1731 = vlaneseq
    %v1732 = vshrl.u32 %v1731, 7
    %v1733 = vsub.s32 0, %v1732
    %v1734 = vrot.slane %v87, %v1733
    %1735 = vrot.lane.b32.xlu0 %v77, 96
    %v1736 = vpop.permute.xlu0 %1735
    %1737 = vrot.lane.b32.xlu0 %v78, 96
    %v1738 = vpop.permute.xlu0 %1737
    %v1742 = vsel %vm151, %v1728, 0
    %1744 = vmatprep.subr.mxu0 0.0
    %1745 = vmatpush1.msra.mxu0 %v1736
    %1746 = vmatprep.subr.mxu0 0.0
    %1747 = vmatpush1.msra.mxu0 %v1738
    %1748 = vmatprep.subr.mxu0 0.0
    %1749 = vmatpush1.msra.mxu0 0.0
    %1750 = vmatprep.subr.mxu0 0.0
    %1751 = vmatpush1.msra.mxu0 0.0
    %1752 = vmatprep.subr.mxu0 0.0
    %1753 = vmatpush1.msra.mxu0 0.0
    %1754 = vmatprep.subr.mxu0 0.0
    %1755 = vmatpush1.msra.mxu0 0.0
    %1756 = vmatprep.subr.mxu0 0.0
    %1757 = vmatpush1.msra.mxu0 0.0
    %1758 = vmatprep.subr.mxu0 0.0
    %1759 = vmatpush1.msra.mxu0 0.0
    %1760 = vmatprep.subr.mxu0 0.0
    %1761 = vmatpush1.msra.mxu0 0.0
    %1762 = vmatprep.subr.mxu0 0.0
    %1763 = vmatpush1.msra.mxu0 0.0
    %1764 = vmatprep.subr.mxu0 0.0
    %1765 = vmatpush1.msra.mxu0 0.0
    %1766 = vmatprep.subr.mxu0 0.0
    %1767 = vmatpush1.msra.mxu0 0.0
    %1768 = vmatprep.subr.mxu0 0.0
    %1769 = vmatpush1.msra.mxu0 0.0
    %1770 = vmatprep.subr.mxu0 0.0
    %1771 = vmatpush1.msra.mxu0 0.0
    %1772 = vmatprep.subr.mxu0 0.0
    %1773 = vmatpush1.msra.mxu0 0.0
    %1774 = vmatprep.subr.mxu0 0.0
    %1775 = vmatpush1.msra.mxu0 0.0
    %1776 = vmatprep.subr.mxu0 0.0
    %1777 = vmatpush1.msra.mxu0 0.0
    %1778 = vmatprep.subr.mxu0 0.0
    %1779 = vmatpush1.msra.mxu0 0.0
    %1780 = vmatprep.subr.mxu0 0.0
    %1781 = vmatpush1.msra.mxu0 0.0
    %1782 = vmatprep.subr.mxu0 0.0
    %1783 = vmatpush1.msra.mxu0 0.0
    %1784 = vmatprep.subr.mxu0 0.0
    %1785 = vmatpush1.msra.mxu0 0.0
    %1786 = vmatprep.subr.mxu0 0.0
    %1787 = vmatpush1.msra.mxu0 0.0
    %1788 = vmatprep.subr.mxu0 0.0
    %1789 = vmatpush1.msra.mxu0 0.0
    %1790 = vmatprep.subr.mxu0 0.0
    %1791 = vmatpush1.msra.mxu0 0.0
    %1792 = vmatprep.subr.mxu0 0.0
    %1793 = vmatpush1.msra.mxu0 0.0
    %1794 = vmatprep.subr.mxu0 0.0
    %1795 = vmatpush1.msra.mxu0 0.0
    %1796 = vmatprep.subr.mxu0 0.0
    %1797 = vmatpush1.msra.mxu0 0.0
    %1798 = vmatprep.subr.mxu0 0.0
    %1799 = vmatpush1.msra.mxu0 0.0
    %1800 = vmatprep.subr.mxu0 0.0
    %1801 = vmatpush1.msra.mxu0 0.0
    %1802 = vmatprep.subr.mxu0 0.0
    %1803 = vmatpush1.msra.mxu0 0.0
    %1804 = vmatprep.subr.mxu0 0.0
    %1805 = vmatpush1.msra.mxu0 0.0
    %1806 = vmatprep.subr.mxu0 0.0
    %1807 = vmatpush1.msra.mxu0 0.0
    %1808 = vmatprep.mubr.f32.mxu0 0.0
    %1809 = vmatmul.mubr.f32.gmra.mrb[0].mxu0 %v1742
    %v1810 = vpop.f32.mrb[0].mxu0
    %v1811 = vadd.f32 %v1734, %v1810
    %v1812 = vpop.f32.mrb[0].mxu0
    %1813 = vdwg.mxu0
    %vm1814 = vcmp.ge.f32.partialorder %v1811, 0.0
    %v1815 = vmul.f32 %v1811, 0.01
    %v1816 = vsel %vm1814, %v1811, %v1815
    %1817 = vrot.lane.b32.xlu0 %v75, 48
    %v1818 = vpop.permute.xlu0 %1817
    %1819 = vrot.lane.b32.xlu0 %v76, 48
    %v1820 = vpop.permute.xlu0 %1819
    %1821 = vrot.lane.b32.xlu0 %v77, 48
    %v1822 = vpop.permute.xlu0 %1821
    %1823 = vrot.lane.b32.xlu0 %v78, 48
    %v1824 = vpop.permute.xlu0 %1823
    %1830 = vrot.lane.b32.xlu0 %v1641, 112
    %v1831 = vpop.permute.xlu0 %1830
    %v1834 = vsel %vm225, %v1816, 0
    %1836 = vmatprep.subr.mxu0 0.0
    %1837 = vmatpush1.msra.mxu0 %v1818
    %1838 = vmatprep.subr.mxu0 0.0
    %1839 = vmatpush1.msra.mxu0 %v1820
    %1840 = vmatprep.subr.mxu0 0.0
    %1841 = vmatpush1.msra.mxu0 %v1822
    %1842 = vmatprep.subr.mxu0 0.0
    %1843 = vmatpush1.msra.mxu0 %v1824
    %1844 = vmatprep.subr.mxu0 0.0
    %1845 = vmatpush1.msra.mxu0 0.0
    %1846 = vmatprep.subr.mxu0 0.0
    %1847 = vmatpush1.msra.mxu0 0.0
    %1848 = vmatprep.subr.mxu0 0.0
    %1849 = vmatpush1.msra.mxu0 0.0
    %1850 = vmatprep.subr.mxu0 0.0
    %1851 = vmatpush1.msra.mxu0 0.0
    %1852 = vmatprep.subr.mxu0 0.0
    %1853 = vmatpush1.msra.mxu0 0.0
    %1854 = vmatprep.subr.mxu0 0.0
    %1855 = vmatpush1.msra.mxu0 0.0
    %1856 = vmatprep.subr.mxu0 0.0
    %1857 = vmatpush1.msra.mxu0 0.0
    %1858 = vmatprep.subr.mxu0 0.0
    %1859 = vmatpush1.msra.mxu0 0.0
    %1860 = vmatprep.subr.mxu0 0.0
    %1861 = vmatpush1.msra.mxu0 0.0
    %1862 = vmatprep.subr.mxu0 0.0
    %1863 = vmatpush1.msra.mxu0 0.0
    %1864 = vmatprep.subr.mxu0 0.0
    %1865 = vmatpush1.msra.mxu0 0.0
    %1866 = vmatprep.subr.mxu0 0.0
    %1867 = vmatpush1.msra.mxu0 0.0
    %1868 = vmatprep.subr.mxu0 0.0
    %1869 = vmatpush1.msra.mxu0 0.0
    %1870 = vmatprep.subr.mxu0 0.0
    %1871 = vmatpush1.msra.mxu0 0.0
    %1872 = vmatprep.subr.mxu0 0.0
    %1873 = vmatpush1.msra.mxu0 0.0
    %1874 = vmatprep.subr.mxu0 0.0
    %1875 = vmatpush1.msra.mxu0 0.0
    %1876 = vmatprep.subr.mxu0 0.0
    %1877 = vmatpush1.msra.mxu0 0.0
    %1878 = vmatprep.subr.mxu0 0.0
    %1879 = vmatpush1.msra.mxu0 0.0
    %1880 = vmatprep.subr.mxu0 0.0
    %1881 = vmatpush1.msra.mxu0 0.0
    %1882 = vmatprep.subr.mxu0 0.0
    %1883 = vmatpush1.msra.mxu0 0.0
    %1884 = vmatprep.subr.mxu0 0.0
    %1885 = vmatpush1.msra.mxu0 0.0
    %1886 = vmatprep.subr.mxu0 0.0
    %1887 = vmatpush1.msra.mxu0 0.0
    %1888 = vmatprep.subr.mxu0 0.0
    %1889 = vmatpush1.msra.mxu0 0.0
    %1890 = vmatprep.subr.mxu0 0.0
    %1891 = vmatpush1.msra.mxu0 0.0
    %1892 = vmatprep.subr.mxu0 0.0
    %1893 = vmatpush1.msra.mxu0 0.0
    %1894 = vmatprep.subr.mxu0 0.0
    %1895 = vmatpush1.msra.mxu0 0.0
    %1896 = vmatprep.subr.mxu0 0.0
    %1897 = vmatpush1.msra.mxu0 0.0
    %1898 = vmatprep.subr.mxu0 0.0
    %1899 = vmatpush1.msra.mxu0 0.0
    %1900 = vmatprep.mubr.f32.mxu0 0.0
    %1901 = vmatmul.mubr.f32.gmra.mrb[0].mxu0 %v1834
    %v1902 = vpop.f32.mrb[0].mxu0
    %v1903 = vadd.f32 %v1831, %v1902
    %v1904 = vpop.f32.mrb[0].mxu0
    %1905 = vdwg.mxu0
    %1907 = vrot.lane.b32.xlu0 %v1903, 16
    %v1908 = vpop.permute.xlu0 %1907
    %v1910 = vsel %vm151, %v1728, %v1908
    %vm1911 = vcmask 523264
    %v1912 = vsel %vm1911, %v1910, 0.0
    %1913 = vst [vmem:[%s5] sm:$0xff] %v1912
    // Predicated region
    $region38: #{encoder_addition_forward.1} parent=1 // pred_check
      _
    $region39: #{encoder_addition_forward.1} parent=1 // pred_check_branch
      %1915 = sbr.rel (0) target = $region41
    $region40: #{encoder_addition_forward.1} parent=1 // pred_region
      _
    $region41: #{encoder_addition_forward.1} parent=1 // pred_fallthru
      _
    // Predicated region
    $region42: #{encoder_addition_forward.1} parent=1 // pred_check
      _
    $region43: #{encoder_addition_forward.1} parent=1 // pred_check_branch
      %1917 = sbr.rel (0) target = $region45
    $region44: #{encoder_addition_forward.1} parent=1 // pred_region
      _
    $region45: #{encoder_addition_forward.1} parent=1 // pred_fallthru
      _
    %1918 = vsyncpa [#allocation3], 1
    %1919 = vsyncpa [#allocation5], 1
    %1920 = vsyncpa [#allocation8], 1

</llo_original>
